<compile_context>
chip_gen: v5e
topology: v5e:2x2
jax: 0.10.0
libtpu: 0.0.40
codegen_flags: <defaults>
</compile_context>

<pallas_src>
import numpy as np

import jax
import jax.numpy as jnp
from jax.experimental import pallas as pl
from jax.experimental.pallas import tpu as pltpu

EPS = 1e-5          # torch.nn.BatchNorm2d default
VAL_HIDDEN = 256    # TorchValHead hard-codes Linear(board**2, 256)


def _round_up(x, m):
    return ((x + m - 1) // m) * m


# ----------------------------------------------------------------------------
# Fused network builder
# ----------------------------------------------------------------------------
def build_torch_net(residual_blocks, input_channels, filters, board_size, batch,
                    compute_dtype=jnp.bfloat16):
    """Returns (prepare_params, forward) implementing TorchNet.forward."""
    N, H, W = batch, board_size, board_size
    HW = H * W
    rows = N * HW                                    # lane axis of activations
    C = _round_up(max(input_channels, filters), 8)   # padded channel count
    n_conv = 1 + 2 * residual_blocks                 # number of 3x3 conv layers
    pol_dim = HW + 1
    pol_pad = _round_up(pol_dim, 128)
    val_pad = 128
    fc_width = max(pol_pad, VAL_HIDDEN, val_pad)
    inv_rows = 1.0 / rows
    cdt = compute_dtype

    # tap order t = (dy+1)*3 + (dx+1), matching the conv-weight re-layout below
    tap_offsets = [(dy, dx) for dy in (-1, 0, 1) for dx in (-1, 0, 1)]

    # ---------------- constant masks (built once on host) -------------------
    # rows 0..8  : per-tap validity masks (0 where the 3x3 tap falls outside
    #              the padded board), consumed together with pltpu.roll.
    # rows 16..  : per-sample masks (1 where lane p belongs to sample n),
    #              used to fold the NCHW Flatten into the FC matmuls.
    masks_np = np.zeros((16 + N, rows), np.float32)
    for t, (dy, dx) in enumerate(tap_offsets):
        for p in range(rows):
            hp = (p % HW) // W
            wp = p % W
            if 0 <= hp + dy < H and 0 <= wp + dx < W:
                masks_np[t, p] = 1.0
    for n in range(N):
        masks_np[16 + n, n * HW:(n + 1) * HW] = 1.0
    masks_const = jnp.asarray(masks_np)

    # ------------------------------- kernel ---------------------------------
    def kernel(x_ref, masks_ref, convw_ref, bn_ref, headw_ref, fcw_ref, fcb_ref,
               pol_ref, val_ref):
        tap_masks = [masks_ref[t:t + 1, :] for t in range(9)]     # (1, rows)
        smask = masks_ref[16:16 + N, :]                           # (N, rows)

        def bn_relu(acc, layer, nch, skip=None):
            # Training-mode BatchNorm2d: per-channel stats over (N,H,W)=lanes,
            # two-pass (centered) variance for f32 accuracy.
            row = bn_ref[layer]                                   # (C, 2)
            gamma = row[0:nch, 0:1]
            beta = row[0:nch, 1:2]
            mean = jnp.sum(acc, axis=1, keepdims=True) * inv_rows
            cen = acc - mean
            var = jnp.sum(cen * cen, axis=1, keepdims=True) * inv_rows
            y = cen * jax.lax.rsqrt(var + EPS) * gamma + beta
            if skip is not None:
                y = y + skip
            return jnp.maximum(y, 0.0)

        def conv3x3(xin, layer, skip=None):
            # "same" 3x3 conv on the lane-dense (C, N*H*W) layout: per tap a
            # lane roll (XLU) + validity mask (VPU) + one small MXU matmul,
            # accumulated in f32.  The roll wraps across samples only where
            # the tap is invalid, and those lanes are masked to zero.
            acc = None
            for t, (dy, dx) in enumerate(tap_offsets):
                s = dy * W + dx
                tap = xin if s == 0 else pltpu.roll(xin, shift=(-s) % rows, axis=1)
                if not (dy == 0 and dx == 0):
                    tap = tap * tap_masks[t]
                w = convw_ref[layer * 9 + t]                      # (C, C) bf16
                part = jnp.dot(w, tap.astype(cdt),
                               preferred_element_type=jnp.float32)
                acc = part if acc is None else acc + part
            return bn_relu(acc, layer, C, skip=skip)

        # ---- trunk: conv block + residual blocks, all VMEM resident --------
        x = conv3x3(x_ref[...], 0)
        for r in range(residual_blocks):
            skip = x
            h = conv3x3(x, 1 + 2 * r)
            x = conv3x3(h, 2 + 2 * r, skip=skip)

        # ---- fused policy/value 1x1 conv + BN + ReLU (3 real channels) -----
        head = jnp.dot(headw_ref[...], x.astype(cdt),
                       preferred_element_type=jnp.float32)        # (8, rows)
        head = bn_relu(head, n_conv, 8)

        # ---- heads: NCHW Flatten folded into FC weights via sample masks ---
        p0 = (head[0:1, :] * smask).astype(cdt)                   # (N, rows)
        p1 = (head[1:2, :] * smask).astype(cdt)
        vv = (head[2:3, :] * smask).astype(cdt)

        polw0 = fcw_ref[0:rows, 0:pol_pad]
        polw1 = fcw_ref[rows:2 * rows, 0:pol_pad]
        v1w = fcw_ref[2 * rows:3 * rows, 0:VAL_HIDDEN]
        v2w = fcw_ref[3 * rows:3 * rows + VAL_HIDDEN, 0:val_pad]

        # policy FC (output padded to 128 lanes -> dense store, sliced outside)
        pol_ref[...] = (
            jnp.dot(p0, polw0, preferred_element_type=jnp.float32)
            + jnp.dot(p1, polw1, preferred_element_type=jnp.float32)
            + fcb_ref[0:1, 0:pol_pad])

        # value FCs: Linear -> ReLU -> Linear -> Tanh (padded to 128 lanes)
        v1 = jnp.maximum(
            jnp.dot(vv, v1w, preferred_element_type=jnp.float32)
            + fcb_ref[1:2, 0:VAL_HIDDEN], 0.0)
        val_ref[...] = jnp.tanh(
            jnp.dot(v1.astype(cdt), v2w, preferred_element_type=jnp.float32)
            + fcb_ref[2:3, 0:val_pad])

    # rough VMEM footprint (inputs + outputs + a few live activations) used to
    # size the scoped-VMEM limit (v5e default is only 16 MiB; cap at 64 MiB).
    est_bytes = (
        4 * (C * rows + (16 + N) * rows + (n_conv + 1) * C * 2
             + 3 * fc_width + N * (pol_pad + val_pad) + 8 * C * rows)
        + 2 * (n_conv * 9 * C * C + 8 * C + (3 * rows + VAL_HIDDEN) * fc_width))
    vmem_limit = int(min(64 * 2 ** 20, max(32 * 2 ** 20, 2 * est_bytes)))

    vmem = pl.BlockSpec(memory_space=pltpu.MemorySpace.VMEM)
    fused_call = pl.pallas_call(
        kernel,
        out_shape=(jax.ShapeDtypeStruct((N, pol_pad), jnp.float32),
                   jax.ShapeDtypeStruct((N, val_pad), jnp.float32)),
        in_specs=[vmem] * 7,
        out_specs=(vmem, vmem),
        compiler_params=pltpu.CompilerParams(vmem_limit_bytes=vmem_limit),
    )

    # --------------------- one-time weight re-layout -------------------------
    def _conv_taps(w_oihw):
        # torch (Cout, Cin, 3, 3) -> (9, C, C) with tap index t = ky*3 + kx.
        cout, cin = w_oihw.shape[0], w_oihw.shape[1]
        w = jnp.transpose(w_oihw, (2, 3, 0, 1)).reshape(9, cout, cin)
        return jnp.pad(w, ((0, 0), (0, C - cout), (0, C - cin)))

    def _bn_row(gamma, beta):
        g = jnp.pad(gamma, (0, C - gamma.shape[0]), constant_values=1.0)
        b = jnp.pad(beta, (0, C - beta.shape[0]))
        return jnp.stack([g, b], axis=1)                          # (C, 2)

    def prepare_params(params):
        convs = [_conv_taps(params["conv_w"])]
        bns = [_bn_row(params["conv_gamma"], params["conv_beta"])]
        for rb in params["res"]:
            convs += [_conv_taps(rb["w1"]), _conv_taps(rb["w2"])]
            bns += [_bn_row(rb["g1"], rb["b1"]), _bn_row(rb["g2"], rb["b2"])]
        conv_w = jnp.concatenate(convs, axis=0).astype(cdt)       # (9*n_conv,C,C)

        # fused 3-channel (2 pol + 1 val) 1x1 head conv + its BN parameters
        hw = jnp.concatenate([params["pol_w"].reshape(2, filters),
                              params["val_w"].reshape(1, filters)], axis=0)
        head_w = jnp.pad(hw, ((0, 8 - 3), (0, C - filters))).astype(cdt)
        bns.append(_bn_row(
            jnp.concatenate([params["pol_gamma"], params["val_gamma"]]),
            jnp.concatenate([params["pol_beta"], params["val_beta"]])))
        bn = jnp.stack(bns, axis=0).astype(jnp.float32)           # (n_conv+1,C,2)

        # FC weights with the NCHW Flatten folded in (per-sample tiling).
        blocks = []
        for c in range(2):                                        # policy channels
            wc = params["pol_fc_w"][:, c * HW:(c + 1) * HW].T     # (HW, pol_dim)
            wc = jnp.tile(wc, (N, 1))                             # (rows, pol_dim)
            blocks.append(jnp.pad(wc, ((0, 0), (0, fc_width - pol_dim))))
        v1w = jnp.tile(params["val_fc1_w"].T, (N, 1))             # (rows, 256)
        blocks.append(jnp.pad(v1w, ((0, 0), (0, fc_width - VAL_HIDDEN))))
        v2w = params["val_fc2_w"].T                               # (256, 1)
        blocks.append(jnp.pad(v2w, ((0, 0), (0, fc_width - 1))))
        fc_w = jnp.concatenate(blocks, axis=0).astype(cdt)        # (3*rows+256,W)

        fc_b = jnp.zeros((3, fc_width), jnp.float32)
        fc_b = fc_b.at[0, :pol_dim].set(params["pol_fc_b"])
        fc_b = fc_b.at[1, :VAL_HIDDEN].set(params["val_fc1_b"])
        fc_b = fc_b.at[2, :1].set(params["val_fc2_b"])

        return [masks_const, conv_w, bn, head_w, fc_w, fc_b]

    # ------------------------------ forward ----------------------------------
    @jax.jit
    def forward(weights, x_nchw):
        # NCHW -> lane-dense (C, N*H*W) layout, channels padded to a sublane
        # multiple.  This transpose/pad + the output slices are the only glue
        # outside the single fused kernel.
        x = jnp.transpose(x_nchw.astype(jnp.float32), (1, 0, 2, 3))
        x = x.reshape(input_channels, rows)
        x = jnp.pad(x, ((0, C - input_channels), (0, 0)))
        pol, val = fused_call(x, *weights)
        return pol[:, :pol_dim], val[:, :1]

    return prepare_params, forward


# ----------------------------------------------------------------------------
# Parameters (deterministic, shapes mirror TorchNet.__init__)
# ----------------------------------------------------------------------------
def init_params(residual_blocks, input_channels, filters, board_size):
    key = jax.random.PRNGKey(42)
    keys = iter(jax.random.split(key, 64))

    def nrm(shape):
        return jax.random.normal(next(keys), shape, jnp.float32) * 0.1

    p = {
        "conv_w": nrm((filters, input_channels, 3, 3)),
        "conv_gamma": jnp.ones((filters,), jnp.float32),
        "conv_beta": jnp.zeros((filters,), jnp.float32),
        "res": [],
        "pol_w": nrm((2, filters, 1, 1)),
        "pol_gamma": jnp.ones((2,), jnp.float32),
        "pol_beta": jnp.zeros((2,), jnp.float32),
        "pol_fc_w": nrm((board_size ** 2 + 1, board_size ** 2 * 2)),
        "pol_fc_b": nrm((board_size ** 2 + 1,)),
        "val_w": nrm((1, filters, 1, 1)),
        "val_gamma": jnp.ones((1,), jnp.float32),
        "val_beta": jnp.zeros((1,), jnp.float32),
        "val_fc1_w": nrm((VAL_HIDDEN, board_size ** 2)),
        "val_fc1_b": nrm((VAL_HIDDEN,)),
        "val_fc2_w": nrm((1, VAL_HIDDEN)),
        "val_fc2_b": nrm((1,)),
    }
    for _ in range(residual_blocks):
        p["res"].append(dict(
            w1=nrm((filters, filters, 3, 3)),
            g1=jnp.ones((filters,), jnp.float32),
            b1=jnp.zeros((filters,), jnp.float32),
            w2=nrm((filters, filters, 3, 3)),
            g2=jnp.ones((filters,), jnp.float32),
            b2=jnp.zeros((filters,), jnp.float32),
        ))
    return p


if __name__ == "__main__":
    residual_blocks = 2
    input_channels = 4
    filters = 8
    board_size = 8
    batch = 2

    params = init_params(residual_blocks, input_channels, filters, board_size)
    prepare_params, forward = build_torch_net(
        residual_blocks, input_channels, filters, board_size, batch)
    weights = prepare_params(params)   # one-time weight re-layout (off hot path)

    x = jax.random.normal(jax.random.PRNGKey(0),
                          (batch, input_channels, board_size, board_size),
                          jnp.float32)   # NCHW, matching the PyTorch module

    policy, value = forward(weights, x)
    jax.block_until_ready((policy, value))

    assert policy.shape == (batch, board_size ** 2 + 1)
    assert value.shape == (batch, 1)
    assert bool(jnp.all(jnp.isfinite(policy))) and bool(jnp.all(jnp.isfinite(value)))
    print("KERNEL_OK")
</pallas_src>

<mosaic_0001>
module attributes {stable_mosaic.version = 11 : i64} {
  func.func @kernel(%arg0: memref<8x128xf32, #tpu.memory_space<vmem>>, %arg1: memref<18x128xf32, #tpu.memory_space<vmem>>, %arg2: memref<45x8x8xbf16, #tpu.memory_space<vmem>>, %arg3: memref<6x8x2xf32, #tpu.memory_space<vmem>>, %arg4: memref<8x8xbf16, #tpu.memory_space<vmem>>, %arg5: memref<640x256xbf16, #tpu.memory_space<vmem>>, %arg6: memref<3x256xf32, #tpu.memory_space<vmem>>, %arg7: memref<2x128xf32, #tpu.memory_space<vmem>>, %arg8: memref<2x128xf32, #tpu.memory_space<vmem>>) attributes {dimension_semantics = [], scalar_prefetch = 0 : i64, scratch_operands = 0 : i64, tpu.core_type = #tpu.core_type<tc>} {
    %c0 = arith.constant 0 : index
    %c0_0 = arith.constant 0 : index
    %0 = vector.load %arg1[%c0, %c0_0] : memref<18x128xf32, #tpu.memory_space<vmem>>, vector<1x128xf32>
    %c1 = arith.constant 1 : index
    %c0_1 = arith.constant 0 : index
    %1 = vector.load %arg1[%c1, %c0_1] : memref<18x128xf32, #tpu.memory_space<vmem>>, vector<1x128xf32>
    %c2 = arith.constant 2 : index
    %c0_2 = arith.constant 0 : index
    %2 = vector.load %arg1[%c2, %c0_2] : memref<18x128xf32, #tpu.memory_space<vmem>>, vector<1x128xf32>
    %c3 = arith.constant 3 : index
    %c0_3 = arith.constant 0 : index
    %3 = vector.load %arg1[%c3, %c0_3] : memref<18x128xf32, #tpu.memory_space<vmem>>, vector<1x128xf32>
    %c5 = arith.constant 5 : index
    %c0_4 = arith.constant 0 : index
    %4 = vector.load %arg1[%c5, %c0_4] : memref<18x128xf32, #tpu.memory_space<vmem>>, vector<1x128xf32>
    %c6 = arith.constant 6 : index
    %c0_5 = arith.constant 0 : index
    %5 = vector.load %arg1[%c6, %c0_5] : memref<18x128xf32, #tpu.memory_space<vmem>>, vector<1x128xf32>
    %c7 = arith.constant 7 : index
    %c0_6 = arith.constant 0 : index
    %6 = vector.load %arg1[%c7, %c0_6] : memref<18x128xf32, #tpu.memory_space<vmem>>, vector<1x128xf32>
    %c8 = arith.constant 8 : index
    %c0_7 = arith.constant 0 : index
    %7 = vector.load %arg1[%c8, %c0_7] : memref<18x128xf32, #tpu.memory_space<vmem>>, vector<1x128xf32>
    %c16 = arith.constant 16 : index
    %c0_8 = arith.constant 0 : index
    %8 = vector.load %arg1[%c16, %c0_8] : memref<18x128xf32, #tpu.memory_space<vmem>>, vector<2x128xf32>
    %c0_9 = arith.constant 0 : index
    %c0_10 = arith.constant 0 : index
    %9 = vector.load %arg0[%c0_9, %c0_10] : memref<8x128xf32, #tpu.memory_space<vmem>>, vector<8x128xf32>
    %c9_i32 = arith.constant 9 : i32
    %10 = tpu.dynamic_rotate %9 by %c9_i32 dim 1 : vector<8x128xf32>, i32 -> vector<8x128xf32>
    %11 = vector.broadcast %0 : vector<1x128xf32> to vector<8x128xf32>
    %12 = arith.mulf %10, %11 : vector<8x128xf32>
    %c0_11 = arith.constant 0 : index
    %c0_12 = arith.constant 0 : index
    %c0_13 = arith.constant 0 : index
    %13 = vector.load %arg2[%c0_11, %c0_12, %c0_13] : memref<45x8x8xbf16, #tpu.memory_space<vmem>>, vector<1x8x8xbf16>
    %14 = vector.shape_cast %13 : vector<1x8x8xbf16> to vector<8x8xbf16>
    %15 = arith.truncf %12 : vector<8x128xf32> to vector<8x128xbf16>
    %cst = arith.constant dense<0.000000e+00> : vector<8x128xf32>
    %16 = tpu.matmul %14, %15, %cst {dimension_numbers = #tpu.dot_dimension_numbers<[1], [0], [0], [1], [0, 0, 1, 1], [], []>} : vector<8x8xbf16>, vector<8x128xbf16>, vector<8x128xf32> -> vector<8x128xf32>
    %c8_i32 = arith.constant 8 : i32
    %17 = tpu.dynamic_rotate %9 by %c8_i32 dim 1 : vector<8x128xf32>, i32 -> vector<8x128xf32>
    %18 = vector.broadcast %1 : vector<1x128xf32> to vector<8x128xf32>
    %19 = arith.mulf %17, %18 : vector<8x128xf32>
    %c1_14 = arith.constant 1 : index
    %c0_15 = arith.constant 0 : index
    %c0_16 = arith.constant 0 : index
    %20 = vector.load %arg2[%c1_14, %c0_15, %c0_16] : memref<45x8x8xbf16, #tpu.memory_space<vmem>>, vector<1x8x8xbf16>
    %21 = vector.shape_cast %20 : vector<1x8x8xbf16> to vector<8x8xbf16>
    %22 = arith.truncf %19 : vector<8x128xf32> to vector<8x128xbf16>
    %cst_17 = arith.constant dense<0.000000e+00> : vector<8x128xf32>
    %23 = tpu.matmul %21, %22, %cst_17 {dimension_numbers = #tpu.dot_dimension_numbers<[1], [0], [0], [1], [0, 0, 1, 1], [], []>} : vector<8x8xbf16>, vector<8x128xbf16>, vector<8x128xf32> -> vector<8x128xf32>
    %24 = arith.addf %16, %23 : vector<8x128xf32>
    %c7_i32 = arith.constant 7 : i32
    %25 = tpu.dynamic_rotate %9 by %c7_i32 dim 1 : vector<8x128xf32>, i32 -> vector<8x128xf32>
    %26 = vector.broadcast %2 : vector<1x128xf32> to vector<8x128xf32>
    %27 = arith.mulf %25, %26 : vector<8x128xf32>
    %c2_18 = arith.constant 2 : index
    %c0_19 = arith.constant 0 : index
    %c0_20 = arith.constant 0 : index
    %28 = vector.load %arg2[%c2_18, %c0_19, %c0_20] : memref<45x8x8xbf16, #tpu.memory_space<vmem>>, vector<1x8x8xbf16>
    %29 = vector.shape_cast %28 : vector<1x8x8xbf16> to vector<8x8xbf16>
    %30 = arith.truncf %27 : vector<8x128xf32> to vector<8x128xbf16>
    %cst_21 = arith.constant dense<0.000000e+00> : vector<8x128xf32>
    %31 = tpu.matmul %29, %30, %cst_21 {dimension_numbers = #tpu.dot_dimension_numbers<[1], [0], [0], [1], [0, 0, 1, 1], [], []>} : vector<8x8xbf16>, vector<8x128xbf16>, vector<8x128xf32> -> vector<8x128xf32>
    %32 = arith.addf %24, %31 : vector<8x128xf32>
    %c1_i32 = arith.constant 1 : i32
    %33 = tpu.dynamic_rotate %9 by %c1_i32 dim 1 : vector<8x128xf32>, i32 -> vector<8x128xf32>
    %34 = vector.broadcast %3 : vector<1x128xf32> to vector<8x128xf32>
    %35 = arith.mulf %33, %34 : vector<8x128xf32>
    %c3_22 = arith.constant 3 : index
    %c0_23 = arith.constant 0 : index
    %c0_24 = arith.constant 0 : index
    %36 = vector.load %arg2[%c3_22, %c0_23, %c0_24] : memref<45x8x8xbf16, #tpu.memory_space<vmem>>, vector<1x8x8xbf16>
    %37 = vector.shape_cast %36 : vector<1x8x8xbf16> to vector<8x8xbf16>
    %38 = arith.truncf %35 : vector<8x128xf32> to vector<8x128xbf16>
    %cst_25 = arith.constant dense<0.000000e+00> : vector<8x128xf32>
    %39 = tpu.matmul %37, %38, %cst_25 {dimension_numbers = #tpu.dot_dimension_numbers<[1], [0], [0], [1], [0, 0, 1, 1], [], []>} : vector<8x8xbf16>, vector<8x128xbf16>, vector<8x128xf32> -> vector<8x128xf32>
    %40 = arith.addf %32, %39 : vector<8x128xf32>
    %c4 = arith.constant 4 : index
    %c0_26 = arith.constant 0 : index
    %c0_27 = arith.constant 0 : index
    %41 = vector.load %arg2[%c4, %c0_26, %c0_27] : memref<45x8x8xbf16, #tpu.memory_space<vmem>>, vector<1x8x8xbf16>
    %42 = vector.shape_cast %41 : vector<1x8x8xbf16> to vector<8x8xbf16>
    %43 = arith.truncf %9 : vector<8x128xf32> to vector<8x128xbf16>
    %cst_28 = arith.constant dense<0.000000e+00> : vector<8x128xf32>
    %44 = tpu.matmul %42, %43, %cst_28 {dimension_numbers = #tpu.dot_dimension_numbers<[1], [0], [0], [1], [0, 0, 1, 1], [], []>} : vector<8x8xbf16>, vector<8x128xbf16>, vector<8x128xf32> -> vector<8x128xf32>
    %45 = arith.addf %40, %44 : vector<8x128xf32>
    %c127_i32 = arith.constant 127 : i32
    %46 = tpu.dynamic_rotate %9 by %c127_i32 dim 1 : vector<8x128xf32>, i32 -> vector<8x128xf32>
    %47 = vector.broadcast %4 : vector<1x128xf32> to vector<8x128xf32>
    %48 = arith.mulf %46, %47 : vector<8x128xf32>
    %c5_29 = arith.constant 5 : index
    %c0_30 = arith.constant 0 : index
    %c0_31 = arith.constant 0 : index
    %49 = vector.load %arg2[%c5_29, %c0_30, %c0_31] : memref<45x8x8xbf16, #tpu.memory_space<vmem>>, vector<1x8x8xbf16>
    %50 = vector.shape_cast %49 : vector<1x8x8xbf16> to vector<8x8xbf16>
    %51 = arith.truncf %48 : vector<8x128xf32> to vector<8x128xbf16>
    %cst_32 = arith.constant dense<0.000000e+00> : vector<8x128xf32>
    %52 = tpu.matmul %50, %51, %cst_32 {dimension_numbers = #tpu.dot_dimension_numbers<[1], [0], [0], [1], [0, 0, 1, 1], [], []>} : vector<8x8xbf16>, vector<8x128xbf16>, vector<8x128xf32> -> vector<8x128xf32>
    %53 = arith.addf %45, %52 : vector<8x128xf32>
    %c121_i32 = arith.constant 121 : i32
    %54 = tpu.dynamic_rotate %9 by %c121_i32 dim 1 : vector<8x128xf32>, i32 -> vector<8x128xf32>
    %55 = vector.broadcast %5 : vector<1x128xf32> to vector<8x128xf32>
    %56 = arith.mulf %54, %55 : vector<8x128xf32>
    %c6_33 = arith.constant 6 : index
    %c0_34 = arith.constant 0 : index
    %c0_35 = arith.constant 0 : index
    %57 = vector.load %arg2[%c6_33, %c0_34, %c0_35] : memref<45x8x8xbf16, #tpu.memory_space<vmem>>, vector<1x8x8xbf16>
    %58 = vector.shape_cast %57 : vector<1x8x8xbf16> to vector<8x8xbf16>
    %59 = arith.truncf %56 : vector<8x128xf32> to vector<8x128xbf16>
    %cst_36 = arith.constant dense<0.000000e+00> : vector<8x128xf32>
    %60 = tpu.matmul %58, %59, %cst_36 {dimension_numbers = #tpu.dot_dimension_numbers<[1], [0], [0], [1], [0, 0, 1, 1], [], []>} : vector<8x8xbf16>, vector<8x128xbf16>, vector<8x128xf32> -> vector<8x128xf32>
    %61 = arith.addf %53, %60 : vector<8x128xf32>
    %c120_i32 = arith.constant 120 : i32
    %62 = tpu.dynamic_rotate %9 by %c120_i32 dim 1 : vector<8x128xf32>, i32 -> vector<8x128xf32>
    %63 = vector.broadcast %6 : vector<1x128xf32> to vector<8x128xf32>
    %64 = arith.mulf %62, %63 : vector<8x128xf32>
    %c7_37 = arith.constant 7 : index
    %c0_38 = arith.constant 0 : index
    %c0_39 = arith.constant 0 : index
    %65 = vector.load %arg2[%c7_37, %c0_38, %c0_39] : memref<45x8x8xbf16, #tpu.memory_space<vmem>>, vector<1x8x8xbf16>
    %66 = vector.shape_cast %65 : vector<1x8x8xbf16> to vector<8x8xbf16>
    %67 = arith.truncf %64 : vector<8x128xf32> to vector<8x128xbf16>
    %cst_40 = arith.constant dense<0.000000e+00> : vector<8x128xf32>
    %68 = tpu.matmul %66, %67, %cst_40 {dimension_numbers = #tpu.dot_dimension_numbers<[1], [0], [0], [1], [0, 0, 1, 1], [], []>} : vector<8x8xbf16>, vector<8x128xbf16>, vector<8x128xf32> -> vector<8x128xf32>
    %69 = arith.addf %61, %68 : vector<8x128xf32>
    %c119_i32 = arith.constant 119 : i32
    %70 = tpu.dynamic_rotate %9 by %c119_i32 dim 1 : vector<8x128xf32>, i32 -> vector<8x128xf32>
    %71 = vector.broadcast %7 : vector<1x128xf32> to vector<8x128xf32>
    %72 = arith.mulf %70, %71 : vector<8x128xf32>
    %c8_41 = arith.constant 8 : index
    %c0_42 = arith.constant 0 : index
    %c0_43 = arith.constant 0 : index
    %73 = vector.load %arg2[%c8_41, %c0_42, %c0_43] : memref<45x8x8xbf16, #tpu.memory_space<vmem>>, vector<1x8x8xbf16>
    %74 = vector.shape_cast %73 : vector<1x8x8xbf16> to vector<8x8xbf16>
    %75 = arith.truncf %72 : vector<8x128xf32> to vector<8x128xbf16>
    %cst_44 = arith.constant dense<0.000000e+00> : vector<8x128xf32>
    %76 = tpu.matmul %74, %75, %cst_44 {dimension_numbers = #tpu.dot_dimension_numbers<[1], [0], [0], [1], [0, 0, 1, 1], [], []>} : vector<8x8xbf16>, vector<8x128xbf16>, vector<8x128xf32> -> vector<8x128xf32>
    %77 = arith.addf %69, %76 : vector<8x128xf32>
    %c0_45 = arith.constant 0 : index
    %c0_46 = arith.constant 0 : index
    %c0_47 = arith.constant 0 : index
    %78 = vector.load %arg3[%c0_45, %c0_46, %c0_47] : memref<6x8x2xf32, #tpu.memory_space<vmem>>, vector<1x8x2xf32>
    %79 = vector.shape_cast %78 : vector<1x8x2xf32> to vector<8x2xf32>
    %80 = vector.extract_strided_slice %79 {offsets = [0, 0], sizes = [8, 1], strides = [1, 1]} : vector<8x2xf32> to vector<8x1xf32>
    %81 = vector.extract_strided_slice %79 {offsets = [0, 1], sizes = [8, 1], strides = [1, 1]} : vector<8x2xf32> to vector<8x1xf32>
    %cst_48 = arith.constant dense<0.000000e+00> : vector<8xf32>
    %82 = vector.multi_reduction <add>, %77, %cst_48 [1] : vector<8x128xf32> to vector<8xf32>
    %83 = vector.shape_cast %82 : vector<8xf32> to vector<8x1xf32>
    %cst_49 = arith.constant 7.812500e-03 : f32
    %84 = vector.broadcast %cst_49 : f32 to vector<8x1xf32>
    %85 = arith.mulf %83, %84 : vector<8x1xf32>
    %86 = vector.broadcast %85 : vector<8x1xf32> to vector<8x128xf32>
    %87 = arith.subf %77, %86 : vector<8x128xf32>
    %88 = arith.mulf %87, %87 : vector<8x128xf32>
    %cst_50 = arith.constant dense<0.000000e+00> : vector<8xf32>
    %89 = vector.multi_reduction <add>, %88, %cst_50 [1] : vector<8x128xf32> to vector<8xf32>
    %90 = vector.shape_cast %89 : vector<8xf32> to vector<8x1xf32>
    %cst_51 = arith.constant 7.812500e-03 : f32
    %91 = vector.broadcast %cst_51 : f32 to vector<8x1xf32>
    %92 = arith.mulf %90, %91 : vector<8x1xf32>
    %cst_52 = arith.constant 9.99999974E-6 : f32
    %93 = vector.broadcast %cst_52 : f32 to vector<8x1xf32>
    %94 = arith.addf %92, %93 : vector<8x1xf32>
    %95 = math.rsqrt %94 : vector<8x1xf32>
    %96 = vector.broadcast %95 : vector<8x1xf32> to vector<8x128xf32>
    %97 = arith.mulf %87, %96 : vector<8x128xf32>
    %98 = vector.broadcast %80 : vector<8x1xf32> to vector<8x128xf32>
    %99 = arith.mulf %97, %98 : vector<8x128xf32>
    %100 = vector.broadcast %81 : vector<8x1xf32> to vector<8x128xf32>
    %101 = arith.addf %99, %100 : vector<8x128xf32>
    %cst_53 = arith.constant 0.000000e+00 : f32
    %102 = vector.broadcast %cst_53 : f32 to vector<8x128xf32>
    %103 = arith.maximumf %101, %102 : vector<8x128xf32>
    %c9_i32_54 = arith.constant 9 : i32
    %104 = tpu.dynamic_rotate %103 by %c9_i32_54 dim 1 : vector<8x128xf32>, i32 -> vector<8x128xf32>
    %105 = vector.broadcast %0 : vector<1x128xf32> to vector<8x128xf32>
    %106 = arith.mulf %104, %105 : vector<8x128xf32>
    %c9 = arith.constant 9 : index
    %c0_55 = arith.constant 0 : index
    %c0_56 = arith.constant 0 : index
    %107 = vector.load %arg2[%c9, %c0_55, %c0_56] : memref<45x8x8xbf16, #tpu.memory_space<vmem>>, vector<1x8x8xbf16>
    %108 = vector.shape_cast %107 : vector<1x8x8xbf16> to vector<8x8xbf16>
    %109 = arith.truncf %106 : vector<8x128xf32> to vector<8x128xbf16>
    %cst_57 = arith.constant dense<0.000000e+00> : vector<8x128xf32>
    %110 = tpu.matmul %108, %109, %cst_57 {dimension_numbers = #tpu.dot_dimension_numbers<[1], [0], [0], [1], [0, 0, 1, 1], [], []>} : vector<8x8xbf16>, vector<8x128xbf16>, vector<8x128xf32> -> vector<8x128xf32>
    %c8_i32_58 = arith.constant 8 : i32
    %111 = tpu.dynamic_rotate %103 by %c8_i32_58 dim 1 : vector<8x128xf32>, i32 -> vector<8x128xf32>
    %112 = vector.broadcast %1 : vector<1x128xf32> to vector<8x128xf32>
    %113 = arith.mulf %111, %112 : vector<8x128xf32>
    %c10 = arith.constant 10 : index
    %c0_59 = arith.constant 0 : index
    %c0_60 = arith.constant 0 : index
    %114 = vector.load %arg2[%c10, %c0_59, %c0_60] : memref<45x8x8xbf16, #tpu.memory_space<vmem>>, vector<1x8x8xbf16>
    %115 = vector.shape_cast %114 : vector<1x8x8xbf16> to vector<8x8xbf16>
    %116 = arith.truncf %113 : vector<8x128xf32> to vector<8x128xbf16>
    %cst_61 = arith.constant dense<0.000000e+00> : vector<8x128xf32>
    %117 = tpu.matmul %115, %116, %cst_61 {dimension_numbers = #tpu.dot_dimension_numbers<[1], [0], [0], [1], [0, 0, 1, 1], [], []>} : vector<8x8xbf16>, vector<8x128xbf16>, vector<8x128xf32> -> vector<8x128xf32>
    %118 = arith.addf %110, %117 : vector<8x128xf32>
    %c7_i32_62 = arith.constant 7 : i32
    %119 = tpu.dynamic_rotate %103 by %c7_i32_62 dim 1 : vector<8x128xf32>, i32 -> vector<8x128xf32>
    %120 = vector.broadcast %2 : vector<1x128xf32> to vector<8x128xf32>
    %121 = arith.mulf %119, %120 : vector<8x128xf32>
    %c11 = arith.constant 11 : index
    %c0_63 = arith.constant 0 : index
    %c0_64 = arith.constant 0 : index
    %122 = vector.load %arg2[%c11, %c0_63, %c0_64] : memref<45x8x8xbf16, #tpu.memory_space<vmem>>, vector<1x8x8xbf16>
    %123 = vector.shape_cast %122 : vector<1x8x8xbf16> to vector<8x8xbf16>
    %124 = arith.truncf %121 : vector<8x128xf32> to vector<8x128xbf16>
    %cst_65 = arith.constant dense<0.000000e+00> : vector<8x128xf32>
    %125 = tpu.matmul %123, %124, %cst_65 {dimension_numbers = #tpu.dot_dimension_numbers<[1], [0], [0], [1], [0, 0, 1, 1], [], []>} : vector<8x8xbf16>, vector<8x128xbf16>, vector<8x128xf32> -> vector<8x128xf32>
    %126 = arith.addf %118, %125 : vector<8x128xf32>
    %c1_i32_66 = arith.constant 1 : i32
    %127 = tpu.dynamic_rotate %103 by %c1_i32_66 dim 1 : vector<8x128xf32>, i32 -> vector<8x128xf32>
    %128 = vector.broadcast %3 : vector<1x128xf32> to vector<8x128xf32>
    %129 = arith.mulf %127, %128 : vector<8x128xf32>
    %c12 = arith.constant 12 : index
    %c0_67 = arith.constant 0 : index
    %c0_68 = arith.constant 0 : index
    %130 = vector.load %arg2[%c12, %c0_67, %c0_68] : memref<45x8x8xbf16, #tpu.memory_space<vmem>>, vector<1x8x8xbf16>
    %131 = vector.shape_cast %130 : vector<1x8x8xbf16> to vector<8x8xbf16>
    %132 = arith.truncf %129 : vector<8x128xf32> to vector<8x128xbf16>
    %cst_69 = arith.constant dense<0.000000e+00> : vector<8x128xf32>
    %133 = tpu.matmul %131, %132, %cst_69 {dimension_numbers = #tpu.dot_dimension_numbers<[1], [0], [0], [1], [0, 0, 1, 1], [], []>} : vector<8x8xbf16>, vector<8x128xbf16>, vector<8x128xf32> -> vector<8x128xf32>
    %134 = arith.addf %126, %133 : vector<8x128xf32>
    %c13 = arith.constant 13 : index
    %c0_70 = arith.constant 0 : index
    %c0_71 = arith.constant 0 : index
    %135 = vector.load %arg2[%c13, %c0_70, %c0_71] : memref<45x8x8xbf16, #tpu.memory_space<vmem>>, vector<1x8x8xbf16>
    %136 = vector.shape_cast %135 : vector<1x8x8xbf16> to vector<8x8xbf16>
    %137 = arith.truncf %103 : vector<8x128xf32> to vector<8x128xbf16>
    %cst_72 = arith.constant dense<0.000000e+00> : vector<8x128xf32>
    %138 = tpu.matmul %136, %137, %cst_72 {dimension_numbers = #tpu.dot_dimension_numbers<[1], [0], [0], [1], [0, 0, 1, 1], [], []>} : vector<8x8xbf16>, vector<8x128xbf16>, vector<8x128xf32> -> vector<8x128xf32>
    %139 = arith.addf %134, %138 : vector<8x128xf32>
    %c127_i32_73 = arith.constant 127 : i32
    %140 = tpu.dynamic_rotate %103 by %c127_i32_73 dim 1 : vector<8x128xf32>, i32 -> vector<8x128xf32>
    %141 = vector.broadcast %4 : vector<1x128xf32> to vector<8x128xf32>
    %142 = arith.mulf %140, %141 : vector<8x128xf32>
    %c14 = arith.constant 14 : index
    %c0_74 = arith.constant 0 : index
    %c0_75 = arith.constant 0 : index
    %143 = vector.load %arg2[%c14, %c0_74, %c0_75] : memref<45x8x8xbf16, #tpu.memory_space<vmem>>, vector<1x8x8xbf16>
    %144 = vector.shape_cast %143 : vector<1x8x8xbf16> to vector<8x8xbf16>
    %145 = arith.truncf %142 : vector<8x128xf32> to vector<8x128xbf16>
    %cst_76 = arith.constant dense<0.000000e+00> : vector<8x128xf32>
    %146 = tpu.matmul %144, %145, %cst_76 {dimension_numbers = #tpu.dot_dimension_numbers<[1], [0], [0], [1], [0, 0, 1, 1], [], []>} : vector<8x8xbf16>, vector<8x128xbf16>, vector<8x128xf32> -> vector<8x128xf32>
    %147 = arith.addf %139, %146 : vector<8x128xf32>
    %c121_i32_77 = arith.constant 121 : i32
    %148 = tpu.dynamic_rotate %103 by %c121_i32_77 dim 1 : vector<8x128xf32>, i32 -> vector<8x128xf32>
    %149 = vector.broadcast %5 : vector<1x128xf32> to vector<8x128xf32>
    %150 = arith.mulf %148, %149 : vector<8x128xf32>
    %c15 = arith.constant 15 : index
    %c0_78 = arith.constant 0 : index
    %c0_79 = arith.constant 0 : index
    %151 = vector.load %arg2[%c15, %c0_78, %c0_79] : memref<45x8x8xbf16, #tpu.memory_space<vmem>>, vector<1x8x8xbf16>
    %152 = vector.shape_cast %151 : vector<1x8x8xbf16> to vector<8x8xbf16>
    %153 = arith.truncf %150 : vector<8x128xf32> to vector<8x128xbf16>
    %cst_80 = arith.constant dense<0.000000e+00> : vector<8x128xf32>
    %154 = tpu.matmul %152, %153, %cst_80 {dimension_numbers = #tpu.dot_dimension_numbers<[1], [0], [0], [1], [0, 0, 1, 1], [], []>} : vector<8x8xbf16>, vector<8x128xbf16>, vector<8x128xf32> -> vector<8x128xf32>
    %155 = arith.addf %147, %154 : vector<8x128xf32>
    %c120_i32_81 = arith.constant 120 : i32
    %156 = tpu.dynamic_rotate %103 by %c120_i32_81 dim 1 : vector<8x128xf32>, i32 -> vector<8x128xf32>
    %157 = vector.broadcast %6 : vector<1x128xf32> to vector<8x128xf32>
    %158 = arith.mulf %156, %157 : vector<8x128xf32>
    %c16_82 = arith.constant 16 : index
    %c0_83 = arith.constant 0 : index
    %c0_84 = arith.constant 0 : index
    %159 = vector.load %arg2[%c16_82, %c0_83, %c0_84] : memref<45x8x8xbf16, #tpu.memory_space<vmem>>, vector<1x8x8xbf16>
    %160 = vector.shape_cast %159 : vector<1x8x8xbf16> to vector<8x8xbf16>
    %161 = arith.truncf %158 : vector<8x128xf32> to vector<8x128xbf16>
    %cst_85 = arith.constant dense<0.000000e+00> : vector<8x128xf32>
    %162 = tpu.matmul %160, %161, %cst_85 {dimension_numbers = #tpu.dot_dimension_numbers<[1], [0], [0], [1], [0, 0, 1, 1], [], []>} : vector<8x8xbf16>, vector<8x128xbf16>, vector<8x128xf32> -> vector<8x128xf32>
    %163 = arith.addf %155, %162 : vector<8x128xf32>
    %c119_i32_86 = arith.constant 119 : i32
    %164 = tpu.dynamic_rotate %103 by %c119_i32_86 dim 1 : vector<8x128xf32>, i32 -> vector<8x128xf32>
    %165 = vector.broadcast %7 : vector<1x128xf32> to vector<8x128xf32>
    %166 = arith.mulf %164, %165 : vector<8x128xf32>
    %c17 = arith.constant 17 : index
    %c0_87 = arith.constant 0 : index
    %c0_88 = arith.constant 0 : index
    %167 = vector.load %arg2[%c17, %c0_87, %c0_88] : memref<45x8x8xbf16, #tpu.memory_space<vmem>>, vector<1x8x8xbf16>
    %168 = vector.shape_cast %167 : vector<1x8x8xbf16> to vector<8x8xbf16>
    %169 = arith.truncf %166 : vector<8x128xf32> to vector<8x128xbf16>
    %cst_89 = arith.constant dense<0.000000e+00> : vector<8x128xf32>
    %170 = tpu.matmul %168, %169, %cst_89 {dimension_numbers = #tpu.dot_dimension_numbers<[1], [0], [0], [1], [0, 0, 1, 1], [], []>} : vector<8x8xbf16>, vector<8x128xbf16>, vector<8x128xf32> -> vector<8x128xf32>
    %171 = arith.addf %163, %170 : vector<8x128xf32>
    %c1_90 = arith.constant 1 : index
    %c0_91 = arith.constant 0 : index
    %c0_92 = arith.constant 0 : index
    %172 = vector.load %arg3[%c1_90, %c0_91, %c0_92] : memref<6x8x2xf32, #tpu.memory_space<vmem>>, vector<1x8x2xf32>
    %173 = vector.shape_cast %172 : vector<1x8x2xf32> to vector<8x2xf32>
    %174 = vector.extract_strided_slice %173 {offsets = [0, 0], sizes = [8, 1], strides = [1, 1]} : vector<8x2xf32> to vector<8x1xf32>
    %175 = vector.extract_strided_slice %173 {offsets = [0, 1], sizes = [8, 1], strides = [1, 1]} : vector<8x2xf32> to vector<8x1xf32>
    %cst_93 = arith.constant dense<0.000000e+00> : vector<8xf32>
    %176 = vector.multi_reduction <add>, %171, %cst_93 [1] : vector<8x128xf32> to vector<8xf32>
    %177 = vector.shape_cast %176 : vector<8xf32> to vector<8x1xf32>
    %cst_94 = arith.constant 7.812500e-03 : f32
    %178 = vector.broadcast %cst_94 : f32 to vector<8x1xf32>
    %179 = arith.mulf %177, %178 : vector<8x1xf32>
    %180 = vector.broadcast %179 : vector<8x1xf32> to vector<8x128xf32>
    %181 = arith.subf %171, %180 : vector<8x128xf32>
    %182 = arith.mulf %181, %181 : vector<8x128xf32>
    %cst_95 = arith.constant dense<0.000000e+00> : vector<8xf32>
    %183 = vector.multi_reduction <add>, %182, %cst_95 [1] : vector<8x128xf32> to vector<8xf32>
    %184 = vector.shape_cast %183 : vector<8xf32> to vector<8x1xf32>
    %cst_96 = arith.constant 7.812500e-03 : f32
    %185 = vector.broadcast %cst_96 : f32 to vector<8x1xf32>
    %186 = arith.mulf %184, %185 : vector<8x1xf32>
    %cst_97 = arith.constant 9.99999974E-6 : f32
    %187 = vector.broadcast %cst_97 : f32 to vector<8x1xf32>
    %188 = arith.addf %186, %187 : vector<8x1xf32>
    %189 = math.rsqrt %188 : vector<8x1xf32>
    %190 = vector.broadcast %189 : vector<8x1xf32> to vector<8x128xf32>
    %191 = arith.mulf %181, %190 : vector<8x128xf32>
    %192 = vector.broadcast %174 : vector<8x1xf32> to vector<8x128xf32>
    %193 = arith.mulf %191, %192 : vector<8x128xf32>
    %194 = vector.broadcast %175 : vector<8x1xf32> to vector<8x128xf32>
    %195 = arith.addf %193, %194 : vector<8x128xf32>
    %cst_98 = arith.constant 0.000000e+00 : f32
    %196 = vector.broadcast %cst_98 : f32 to vector<8x128xf32>
    %197 = arith.maximumf %195, %196 : vector<8x128xf32>
    %c9_i32_99 = arith.constant 9 : i32
    %198 = tpu.dynamic_rotate %197 by %c9_i32_99 dim 1 : vector<8x128xf32>, i32 -> vector<8x128xf32>
    %199 = vector.broadcast %0 : vector<1x128xf32> to vector<8x128xf32>
    %200 = arith.mulf %198, %199 : vector<8x128xf32>
    %c18 = arith.constant 18 : index
    %c0_100 = arith.constant 0 : index
    %c0_101 = arith.constant 0 : index
    %201 = vector.load %arg2[%c18, %c0_100, %c0_101] : memref<45x8x8xbf16, #tpu.memory_space<vmem>>, vector<1x8x8xbf16>
    %202 = vector.shape_cast %201 : vector<1x8x8xbf16> to vector<8x8xbf16>
    %203 = arith.truncf %200 : vector<8x128xf32> to vector<8x128xbf16>
    %cst_102 = arith.constant dense<0.000000e+00> : vector<8x128xf32>
    %204 = tpu.matmul %202, %203, %cst_102 {dimension_numbers = #tpu.dot_dimension_numbers<[1], [0], [0], [1], [0, 0, 1, 1], [], []>} : vector<8x8xbf16>, vector<8x128xbf16>, vector<8x128xf32> -> vector<8x128xf32>
    %c8_i32_103 = arith.constant 8 : i32
    %205 = tpu.dynamic_rotate %197 by %c8_i32_103 dim 1 : vector<8x128xf32>, i32 -> vector<8x128xf32>
    %206 = vector.broadcast %1 : vector<1x128xf32> to vector<8x128xf32>
    %207 = arith.mulf %205, %206 : vector<8x128xf32>
    %c19 = arith.constant 19 : index
    %c0_104 = arith.constant 0 : index
    %c0_105 = arith.constant 0 : index
    %208 = vector.load %arg2[%c19, %c0_104, %c0_105] : memref<45x8x8xbf16, #tpu.memory_space<vmem>>, vector<1x8x8xbf16>
    %209 = vector.shape_cast %208 : vector<1x8x8xbf16> to vector<8x8xbf16>
    %210 = arith.truncf %207 : vector<8x128xf32> to vector<8x128xbf16>
    %cst_106 = arith.constant dense<0.000000e+00> : vector<8x128xf32>
    %211 = tpu.matmul %209, %210, %cst_106 {dimension_numbers = #tpu.dot_dimension_numbers<[1], [0], [0], [1], [0, 0, 1, 1], [], []>} : vector<8x8xbf16>, vector<8x128xbf16>, vector<8x128xf32> -> vector<8x128xf32>
    %212 = arith.addf %204, %211 : vector<8x128xf32>
    %c7_i32_107 = arith.constant 7 : i32
    %213 = tpu.dynamic_rotate %197 by %c7_i32_107 dim 1 : vector<8x128xf32>, i32 -> vector<8x128xf32>
    %214 = vector.broadcast %2 : vector<1x128xf32> to vector<8x128xf32>
    %215 = arith.mulf %213, %214 : vector<8x128xf32>
    %c20 = arith.constant 20 : index
    %c0_108 = arith.constant 0 : index
    %c0_109 = arith.constant 0 : index
    %216 = vector.load %arg2[%c20, %c0_108, %c0_109] : memref<45x8x8xbf16, #tpu.memory_space<vmem>>, vector<1x8x8xbf16>
    %217 = vector.shape_cast %216 : vector<1x8x8xbf16> to vector<8x8xbf16>
    %218 = arith.truncf %215 : vector<8x128xf32> to vector<8x128xbf16>
    %cst_110 = arith.constant dense<0.000000e+00> : vector<8x128xf32>
    %219 = tpu.matmul %217, %218, %cst_110 {dimension_numbers = #tpu.dot_dimension_numbers<[1], [0], [0], [1], [0, 0, 1, 1], [], []>} : vector<8x8xbf16>, vector<8x128xbf16>, vector<8x128xf32> -> vector<8x128xf32>
    %220 = arith.addf %212, %219 : vector<8x128xf32>
    %c1_i32_111 = arith.constant 1 : i32
    %221 = tpu.dynamic_rotate %197 by %c1_i32_111 dim 1 : vector<8x128xf32>, i32 -> vector<8x128xf32>
    %222 = vector.broadcast %3 : vector<1x128xf32> to vector<8x128xf32>
    %223 = arith.mulf %221, %222 : vector<8x128xf32>
    %c21 = arith.constant 21 : index
    %c0_112 = arith.constant 0 : index
    %c0_113 = arith.constant 0 : index
    %224 = vector.load %arg2[%c21, %c0_112, %c0_113] : memref<45x8x8xbf16, #tpu.memory_space<vmem>>, vector<1x8x8xbf16>
    %225 = vector.shape_cast %224 : vector<1x8x8xbf16> to vector<8x8xbf16>
    %226 = arith.truncf %223 : vector<8x128xf32> to vector<8x128xbf16>
    %cst_114 = arith.constant dense<0.000000e+00> : vector<8x128xf32>
    %227 = tpu.matmul %225, %226, %cst_114 {dimension_numbers = #tpu.dot_dimension_numbers<[1], [0], [0], [1], [0, 0, 1, 1], [], []>} : vector<8x8xbf16>, vector<8x128xbf16>, vector<8x128xf32> -> vector<8x128xf32>
    %228 = arith.addf %220, %227 : vector<8x128xf32>
    %c22 = arith.constant 22 : index
    %c0_115 = arith.constant 0 : index
    %c0_116 = arith.constant 0 : index
    %229 = vector.load %arg2[%c22, %c0_115, %c0_116] : memref<45x8x8xbf16, #tpu.memory_space<vmem>>, vector<1x8x8xbf16>
    %230 = vector.shape_cast %229 : vector<1x8x8xbf16> to vector<8x8xbf16>
    %231 = arith.truncf %197 : vector<8x128xf32> to vector<8x128xbf16>
    %cst_117 = arith.constant dense<0.000000e+00> : vector<8x128xf32>
    %232 = tpu.matmul %230, %231, %cst_117 {dimension_numbers = #tpu.dot_dimension_numbers<[1], [0], [0], [1], [0, 0, 1, 1], [], []>} : vector<8x8xbf16>, vector<8x128xbf16>, vector<8x128xf32> -> vector<8x128xf32>
    %233 = arith.addf %228, %232 : vector<8x128xf32>
    %c127_i32_118 = arith.constant 127 : i32
    %234 = tpu.dynamic_rotate %197 by %c127_i32_118 dim 1 : vector<8x128xf32>, i32 -> vector<8x128xf32>
    %235 = vector.broadcast %4 : vector<1x128xf32> to vector<8x128xf32>
    %236 = arith.mulf %234, %235 : vector<8x128xf32>
    %c23 = arith.constant 23 : index
    %c0_119 = arith.constant 0 : index
    %c0_120 = arith.constant 0 : index
    %237 = vector.load %arg2[%c23, %c0_119, %c0_120] : memref<45x8x8xbf16, #tpu.memory_space<vmem>>, vector<1x8x8xbf16>
    %238 = vector.shape_cast %237 : vector<1x8x8xbf16> to vector<8x8xbf16>
    %239 = arith.truncf %236 : vector<8x128xf32> to vector<8x128xbf16>
    %cst_121 = arith.constant dense<0.000000e+00> : vector<8x128xf32>
    %240 = tpu.matmul %238, %239, %cst_121 {dimension_numbers = #tpu.dot_dimension_numbers<[1], [0], [0], [1], [0, 0, 1, 1], [], []>} : vector<8x8xbf16>, vector<8x128xbf16>, vector<8x128xf32> -> vector<8x128xf32>
    %241 = arith.addf %233, %240 : vector<8x128xf32>
    %c121_i32_122 = arith.constant 121 : i32
    %242 = tpu.dynamic_rotate %197 by %c121_i32_122 dim 1 : vector<8x128xf32>, i32 -> vector<8x128xf32>
    %243 = vector.broadcast %5 : vector<1x128xf32> to vector<8x128xf32>
    %244 = arith.mulf %242, %243 : vector<8x128xf32>
    %c24 = arith.constant 24 : index
    %c0_123 = arith.constant 0 : index
    %c0_124 = arith.constant 0 : index
    %245 = vector.load %arg2[%c24, %c0_123, %c0_124] : memref<45x8x8xbf16, #tpu.memory_space<vmem>>, vector<1x8x8xbf16>
    %246 = vector.shape_cast %245 : vector<1x8x8xbf16> to vector<8x8xbf16>
    %247 = arith.truncf %244 : vector<8x128xf32> to vector<8x128xbf16>
    %cst_125 = arith.constant dense<0.000000e+00> : vector<8x128xf32>
    %248 = tpu.matmul %246, %247, %cst_125 {dimension_numbers = #tpu.dot_dimension_numbers<[1], [0], [0], [1], [0, 0, 1, 1], [], []>} : vector<8x8xbf16>, vector<8x128xbf16>, vector<8x128xf32> -> vector<8x128xf32>
    %249 = arith.addf %241, %248 : vector<8x128xf32>
    %c120_i32_126 = arith.constant 120 : i32
    %250 = tpu.dynamic_rotate %197 by %c120_i32_126 dim 1 : vector<8x128xf32>, i32 -> vector<8x128xf32>
    %251 = vector.broadcast %6 : vector<1x128xf32> to vector<8x128xf32>
    %252 = arith.mulf %250, %251 : vector<8x128xf32>
    %c25 = arith.constant 25 : index
    %c0_127 = arith.constant 0 : index
    %c0_128 = arith.constant 0 : index
    %253 = vector.load %arg2[%c25, %c0_127, %c0_128] : memref<45x8x8xbf16, #tpu.memory_space<vmem>>, vector<1x8x8xbf16>
    %254 = vector.shape_cast %253 : vector<1x8x8xbf16> to vector<8x8xbf16>
    %255 = arith.truncf %252 : vector<8x128xf32> to vector<8x128xbf16>
    %cst_129 = arith.constant dense<0.000000e+00> : vector<8x128xf32>
    %256 = tpu.matmul %254, %255, %cst_129 {dimension_numbers = #tpu.dot_dimension_numbers<[1], [0], [0], [1], [0, 0, 1, 1], [], []>} : vector<8x8xbf16>, vector<8x128xbf16>, vector<8x128xf32> -> vector<8x128xf32>
    %257 = arith.addf %249, %256 : vector<8x128xf32>
    %c119_i32_130 = arith.constant 119 : i32
    %258 = tpu.dynamic_rotate %197 by %c119_i32_130 dim 1 : vector<8x128xf32>, i32 -> vector<8x128xf32>
    %259 = vector.broadcast %7 : vector<1x128xf32> to vector<8x128xf32>
    %260 = arith.mulf %258, %259 : vector<8x128xf32>
    %c26 = arith.constant 26 : index
    %c0_131 = arith.constant 0 : index
    %c0_132 = arith.constant 0 : index
    %261 = vector.load %arg2[%c26, %c0_131, %c0_132] : memref<45x8x8xbf16, #tpu.memory_space<vmem>>, vector<1x8x8xbf16>
    %262 = vector.shape_cast %261 : vector<1x8x8xbf16> to vector<8x8xbf16>
    %263 = arith.truncf %260 : vector<8x128xf32> to vector<8x128xbf16>
    %cst_133 = arith.constant dense<0.000000e+00> : vector<8x128xf32>
    %264 = tpu.matmul %262, %263, %cst_133 {dimension_numbers = #tpu.dot_dimension_numbers<[1], [0], [0], [1], [0, 0, 1, 1], [], []>} : vector<8x8xbf16>, vector<8x128xbf16>, vector<8x128xf32> -> vector<8x128xf32>
    %265 = arith.addf %257, %264 : vector<8x128xf32>
    %c2_134 = arith.constant 2 : index
    %c0_135 = arith.constant 0 : index
    %c0_136 = arith.constant 0 : index
    %266 = vector.load %arg3[%c2_134, %c0_135, %c0_136] : memref<6x8x2xf32, #tpu.memory_space<vmem>>, vector<1x8x2xf32>
    %267 = vector.shape_cast %266 : vector<1x8x2xf32> to vector<8x2xf32>
    %268 = vector.extract_strided_slice %267 {offsets = [0, 0], sizes = [8, 1], strides = [1, 1]} : vector<8x2xf32> to vector<8x1xf32>
    %269 = vector.extract_strided_slice %267 {offsets = [0, 1], sizes = [8, 1], strides = [1, 1]} : vector<8x2xf32> to vector<8x1xf32>
    %cst_137 = arith.constant dense<0.000000e+00> : vector<8xf32>
    %270 = vector.multi_reduction <add>, %265, %cst_137 [1] : vector<8x128xf32> to vector<8xf32>
    %271 = vector.shape_cast %270 : vector<8xf32> to vector<8x1xf32>
    %cst_138 = arith.constant 7.812500e-03 : f32
    %272 = vector.broadcast %cst_138 : f32 to vector<8x1xf32>
    %273 = arith.mulf %271, %272 : vector<8x1xf32>
    %274 = vector.broadcast %273 : vector<8x1xf32> to vector<8x128xf32>
    %275 = arith.subf %265, %274 : vector<8x128xf32>
    %276 = arith.mulf %275, %275 : vector<8x128xf32>
    %cst_139 = arith.constant dense<0.000000e+00> : vector<8xf32>
    %277 = vector.multi_reduction <add>, %276, %cst_139 [1] : vector<8x128xf32> to vector<8xf32>
    %278 = vector.shape_cast %277 : vector<8xf32> to vector<8x1xf32>
    %cst_140 = arith.constant 7.812500e-03 : f32
    %279 = vector.broadcast %cst_140 : f32 to vector<8x1xf32>
    %280 = arith.mulf %278, %279 : vector<8x1xf32>
    %cst_141 = arith.constant 9.99999974E-6 : f32
    %281 = vector.broadcast %cst_141 : f32 to vector<8x1xf32>
    %282 = arith.addf %280, %281 : vector<8x1xf32>
    %283 = math.rsqrt %282 : vector<8x1xf32>
    %284 = vector.broadcast %283 : vector<8x1xf32> to vector<8x128xf32>
    %285 = arith.mulf %275, %284 : vector<8x128xf32>
    %286 = vector.broadcast %268 : vector<8x1xf32> to vector<8x128xf32>
    %287 = arith.mulf %285, %286 : vector<8x128xf32>
    %288 = vector.broadcast %269 : vector<8x1xf32> to vector<8x128xf32>
    %289 = arith.addf %287, %288 : vector<8x128xf32>
    %290 = arith.addf %289, %103 : vector<8x128xf32>
    %cst_142 = arith.constant 0.000000e+00 : f32
    %291 = vector.broadcast %cst_142 : f32 to vector<8x128xf32>
    %292 = arith.maximumf %290, %291 : vector<8x128xf32>
    %c9_i32_143 = arith.constant 9 : i32
    %293 = tpu.dynamic_rotate %292 by %c9_i32_143 dim 1 : vector<8x128xf32>, i32 -> vector<8x128xf32>
    %294 = vector.broadcast %0 : vector<1x128xf32> to vector<8x128xf32>
    %295 = arith.mulf %293, %294 : vector<8x128xf32>
    %c27 = arith.constant 27 : index
    %c0_144 = arith.constant 0 : index
    %c0_145 = arith.constant 0 : index
    %296 = vector.load %arg2[%c27, %c0_144, %c0_145] : memref<45x8x8xbf16, #tpu.memory_space<vmem>>, vector<1x8x8xbf16>
    %297 = vector.shape_cast %296 : vector<1x8x8xbf16> to vector<8x8xbf16>
    %298 = arith.truncf %295 : vector<8x128xf32> to vector<8x128xbf16>
    %cst_146 = arith.constant dense<0.000000e+00> : vector<8x128xf32>
    %299 = tpu.matmul %297, %298, %cst_146 {dimension_numbers = #tpu.dot_dimension_numbers<[1], [0], [0], [1], [0, 0, 1, 1], [], []>} : vector<8x8xbf16>, vector<8x128xbf16>, vector<8x128xf32> -> vector<8x128xf32>
    %c8_i32_147 = arith.constant 8 : i32
    %300 = tpu.dynamic_rotate %292 by %c8_i32_147 dim 1 : vector<8x128xf32>, i32 -> vector<8x128xf32>
    %301 = vector.broadcast %1 : vector<1x128xf32> to vector<8x128xf32>
    %302 = arith.mulf %300, %301 : vector<8x128xf32>
    %c28 = arith.constant 28 : index
    %c0_148 = arith.constant 0 : index
    %c0_149 = arith.constant 0 : index
    %303 = vector.load %arg2[%c28, %c0_148, %c0_149] : memref<45x8x8xbf16, #tpu.memory_space<vmem>>, vector<1x8x8xbf16>
    %304 = vector.shape_cast %303 : vector<1x8x8xbf16> to vector<8x8xbf16>
    %305 = arith.truncf %302 : vector<8x128xf32> to vector<8x128xbf16>
    %cst_150 = arith.constant dense<0.000000e+00> : vector<8x128xf32>
    %306 = tpu.matmul %304, %305, %cst_150 {dimension_numbers = #tpu.dot_dimension_numbers<[1], [0], [0], [1], [0, 0, 1, 1], [], []>} : vector<8x8xbf16>, vector<8x128xbf16>, vector<8x128xf32> -> vector<8x128xf32>
    %307 = arith.addf %299, %306 : vector<8x128xf32>
    %c7_i32_151 = arith.constant 7 : i32
    %308 = tpu.dynamic_rotate %292 by %c7_i32_151 dim 1 : vector<8x128xf32>, i32 -> vector<8x128xf32>
    %309 = vector.broadcast %2 : vector<1x128xf32> to vector<8x128xf32>
    %310 = arith.mulf %308, %309 : vector<8x128xf32>
    %c29 = arith.constant 29 : index
    %c0_152 = arith.constant 0 : index
    %c0_153 = arith.constant 0 : index
    %311 = vector.load %arg2[%c29, %c0_152, %c0_153] : memref<45x8x8xbf16, #tpu.memory_space<vmem>>, vector<1x8x8xbf16>
    %312 = vector.shape_cast %311 : vector<1x8x8xbf16> to vector<8x8xbf16>
    %313 = arith.truncf %310 : vector<8x128xf32> to vector<8x128xbf16>
    %cst_154 = arith.constant dense<0.000000e+00> : vector<8x128xf32>
    %314 = tpu.matmul %312, %313, %cst_154 {dimension_numbers = #tpu.dot_dimension_numbers<[1], [0], [0], [1], [0, 0, 1, 1], [], []>} : vector<8x8xbf16>, vector<8x128xbf16>, vector<8x128xf32> -> vector<8x128xf32>
    %315 = arith.addf %307, %314 : vector<8x128xf32>
    %c1_i32_155 = arith.constant 1 : i32
    %316 = tpu.dynamic_rotate %292 by %c1_i32_155 dim 1 : vector<8x128xf32>, i32 -> vector<8x128xf32>
    %317 = vector.broadcast %3 : vector<1x128xf32> to vector<8x128xf32>
    %318 = arith.mulf %316, %317 : vector<8x128xf32>
    %c30 = arith.constant 30 : index
    %c0_156 = arith.constant 0 : index
    %c0_157 = arith.constant 0 : index
    %319 = vector.load %arg2[%c30, %c0_156, %c0_157] : memref<45x8x8xbf16, #tpu.memory_space<vmem>>, vector<1x8x8xbf16>
    %320 = vector.shape_cast %319 : vector<1x8x8xbf16> to vector<8x8xbf16>
    %321 = arith.truncf %318 : vector<8x128xf32> to vector<8x128xbf16>
    %cst_158 = arith.constant dense<0.000000e+00> : vector<8x128xf32>
    %322 = tpu.matmul %320, %321, %cst_158 {dimension_numbers = #tpu.dot_dimension_numbers<[1], [0], [0], [1], [0, 0, 1, 1], [], []>} : vector<8x8xbf16>, vector<8x128xbf16>, vector<8x128xf32> -> vector<8x128xf32>
    %323 = arith.addf %315, %322 : vector<8x128xf32>
    %c31 = arith.constant 31 : index
    %c0_159 = arith.constant 0 : index
    %c0_160 = arith.constant 0 : index
    %324 = vector.load %arg2[%c31, %c0_159, %c0_160] : memref<45x8x8xbf16, #tpu.memory_space<vmem>>, vector<1x8x8xbf16>
    %325 = vector.shape_cast %324 : vector<1x8x8xbf16> to vector<8x8xbf16>
    %326 = arith.truncf %292 : vector<8x128xf32> to vector<8x128xbf16>
    %cst_161 = arith.constant dense<0.000000e+00> : vector<8x128xf32>
    %327 = tpu.matmul %325, %326, %cst_161 {dimension_numbers = #tpu.dot_dimension_numbers<[1], [0], [0], [1], [0, 0, 1, 1], [], []>} : vector<8x8xbf16>, vector<8x128xbf16>, vector<8x128xf32> -> vector<8x128xf32>
    %328 = arith.addf %323, %327 : vector<8x128xf32>
    %c127_i32_162 = arith.constant 127 : i32
    %329 = tpu.dynamic_rotate %292 by %c127_i32_162 dim 1 : vector<8x128xf32>, i32 -> vector<8x128xf32>
    %330 = vector.broadcast %4 : vector<1x128xf32> to vector<8x128xf32>
    %331 = arith.mulf %329, %330 : vector<8x128xf32>
    %c32 = arith.constant 32 : index
    %c0_163 = arith.constant 0 : index
    %c0_164 = arith.constant 0 : index
    %332 = vector.load %arg2[%c32, %c0_163, %c0_164] : memref<45x8x8xbf16, #tpu.memory_space<vmem>>, vector<1x8x8xbf16>
    %333 = vector.shape_cast %332 : vector<1x8x8xbf16> to vector<8x8xbf16>
    %334 = arith.truncf %331 : vector<8x128xf32> to vector<8x128xbf16>
    %cst_165 = arith.constant dense<0.000000e+00> : vector<8x128xf32>
    %335 = tpu.matmul %333, %334, %cst_165 {dimension_numbers = #tpu.dot_dimension_numbers<[1], [0], [0], [1], [0, 0, 1, 1], [], []>} : vector<8x8xbf16>, vector<8x128xbf16>, vector<8x128xf32> -> vector<8x128xf32>
    %336 = arith.addf %328, %335 : vector<8x128xf32>
    %c121_i32_166 = arith.constant 121 : i32
    %337 = tpu.dynamic_rotate %292 by %c121_i32_166 dim 1 : vector<8x128xf32>, i32 -> vector<8x128xf32>
    %338 = vector.broadcast %5 : vector<1x128xf32> to vector<8x128xf32>
    %339 = arith.mulf %337, %338 : vector<8x128xf32>
    %c33 = arith.constant 33 : index
    %c0_167 = arith.constant 0 : index
    %c0_168 = arith.constant 0 : index
    %340 = vector.load %arg2[%c33, %c0_167, %c0_168] : memref<45x8x8xbf16, #tpu.memory_space<vmem>>, vector<1x8x8xbf16>
    %341 = vector.shape_cast %340 : vector<1x8x8xbf16> to vector<8x8xbf16>
    %342 = arith.truncf %339 : vector<8x128xf32> to vector<8x128xbf16>
    %cst_169 = arith.constant dense<0.000000e+00> : vector<8x128xf32>
    %343 = tpu.matmul %341, %342, %cst_169 {dimension_numbers = #tpu.dot_dimension_numbers<[1], [0], [0], [1], [0, 0, 1, 1], [], []>} : vector<8x8xbf16>, vector<8x128xbf16>, vector<8x128xf32> -> vector<8x128xf32>
    %344 = arith.addf %336, %343 : vector<8x128xf32>
    %c120_i32_170 = arith.constant 120 : i32
    %345 = tpu.dynamic_rotate %292 by %c120_i32_170 dim 1 : vector<8x128xf32>, i32 -> vector<8x128xf32>
    %346 = vector.broadcast %6 : vector<1x128xf32> to vector<8x128xf32>
    %347 = arith.mulf %345, %346 : vector<8x128xf32>
    %c34 = arith.constant 34 : index
    %c0_171 = arith.constant 0 : index
    %c0_172 = arith.constant 0 : index
    %348 = vector.load %arg2[%c34, %c0_171, %c0_172] : memref<45x8x8xbf16, #tpu.memory_space<vmem>>, vector<1x8x8xbf16>
    %349 = vector.shape_cast %348 : vector<1x8x8xbf16> to vector<8x8xbf16>
    %350 = arith.truncf %347 : vector<8x128xf32> to vector<8x128xbf16>
    %cst_173 = arith.constant dense<0.000000e+00> : vector<8x128xf32>
    %351 = tpu.matmul %349, %350, %cst_173 {dimension_numbers = #tpu.dot_dimension_numbers<[1], [0], [0], [1], [0, 0, 1, 1], [], []>} : vector<8x8xbf16>, vector<8x128xbf16>, vector<8x128xf32> -> vector<8x128xf32>
    %352 = arith.addf %344, %351 : vector<8x128xf32>
    %c119_i32_174 = arith.constant 119 : i32
    %353 = tpu.dynamic_rotate %292 by %c119_i32_174 dim 1 : vector<8x128xf32>, i32 -> vector<8x128xf32>
    %354 = vector.broadcast %7 : vector<1x128xf32> to vector<8x128xf32>
    %355 = arith.mulf %353, %354 : vector<8x128xf32>
    %c35 = arith.constant 35 : index
    %c0_175 = arith.constant 0 : index
    %c0_176 = arith.constant 0 : index
    %356 = vector.load %arg2[%c35, %c0_175, %c0_176] : memref<45x8x8xbf16, #tpu.memory_space<vmem>>, vector<1x8x8xbf16>
    %357 = vector.shape_cast %356 : vector<1x8x8xbf16> to vector<8x8xbf16>
    %358 = arith.truncf %355 : vector<8x128xf32> to vector<8x128xbf16>
    %cst_177 = arith.constant dense<0.000000e+00> : vector<8x128xf32>
    %359 = tpu.matmul %357, %358, %cst_177 {dimension_numbers = #tpu.dot_dimension_numbers<[1], [0], [0], [1], [0, 0, 1, 1], [], []>} : vector<8x8xbf16>, vector<8x128xbf16>, vector<8x128xf32> -> vector<8x128xf32>
    %360 = arith.addf %352, %359 : vector<8x128xf32>
    %c3_178 = arith.constant 3 : index
    %c0_179 = arith.constant 0 : index
    %c0_180 = arith.constant 0 : index
    %361 = vector.load %arg3[%c3_178, %c0_179, %c0_180] : memref<6x8x2xf32, #tpu.memory_space<vmem>>, vector<1x8x2xf32>
    %362 = vector.shape_cast %361 : vector<1x8x2xf32> to vector<8x2xf32>
    %363 = vector.extract_strided_slice %362 {offsets = [0, 0], sizes = [8, 1], strides = [1, 1]} : vector<8x2xf32> to vector<8x1xf32>
    %364 = vector.extract_strided_slice %362 {offsets = [0, 1], sizes = [8, 1], strides = [1, 1]} : vector<8x2xf32> to vector<8x1xf32>
    %cst_181 = arith.constant dense<0.000000e+00> : vector<8xf32>
    %365 = vector.multi_reduction <add>, %360, %cst_181 [1] : vector<8x128xf32> to vector<8xf32>
    %366 = vector.shape_cast %365 : vector<8xf32> to vector<8x1xf32>
    %cst_182 = arith.constant 7.812500e-03 : f32
    %367 = vector.broadcast %cst_182 : f32 to vector<8x1xf32>
    %368 = arith.mulf %366, %367 : vector<8x1xf32>
    %369 = vector.broadcast %368 : vector<8x1xf32> to vector<8x128xf32>
    %370 = arith.subf %360, %369 : vector<8x128xf32>
    %371 = arith.mulf %370, %370 : vector<8x128xf32>
    %cst_183 = arith.constant dense<0.000000e+00> : vector<8xf32>
    %372 = vector.multi_reduction <add>, %371, %cst_183 [1] : vector<8x128xf32> to vector<8xf32>
    %373 = vector.shape_cast %372 : vector<8xf32> to vector<8x1xf32>
    %cst_184 = arith.constant 7.812500e-03 : f32
    %374 = vector.broadcast %cst_184 : f32 to vector<8x1xf32>
    %375 = arith.mulf %373, %374 : vector<8x1xf32>
    %cst_185 = arith.constant 9.99999974E-6 : f32
    %376 = vector.broadcast %cst_185 : f32 to vector<8x1xf32>
    %377 = arith.addf %375, %376 : vector<8x1xf32>
    %378 = math.rsqrt %377 : vector<8x1xf32>
    %379 = vector.broadcast %378 : vector<8x1xf32> to vector<8x128xf32>
    %380 = arith.mulf %370, %379 : vector<8x128xf32>
    %381 = vector.broadcast %363 : vector<8x1xf32> to vector<8x128xf32>
    %382 = arith.mulf %380, %381 : vector<8x128xf32>
    %383 = vector.broadcast %364 : vector<8x1xf32> to vector<8x128xf32>
    %384 = arith.addf %382, %383 : vector<8x128xf32>
    %cst_186 = arith.constant 0.000000e+00 : f32
    %385 = vector.broadcast %cst_186 : f32 to vector<8x128xf32>
    %386 = arith.maximumf %384, %385 : vector<8x128xf32>
    %c9_i32_187 = arith.constant 9 : i32
    %387 = tpu.dynamic_rotate %386 by %c9_i32_187 dim 1 : vector<8x128xf32>, i32 -> vector<8x128xf32>
    %388 = vector.broadcast %0 : vector<1x128xf32> to vector<8x128xf32>
    %389 = arith.mulf %387, %388 : vector<8x128xf32>
    %c36 = arith.constant 36 : index
    %c0_188 = arith.constant 0 : index
    %c0_189 = arith.constant 0 : index
    %390 = vector.load %arg2[%c36, %c0_188, %c0_189] : memref<45x8x8xbf16, #tpu.memory_space<vmem>>, vector<1x8x8xbf16>
    %391 = vector.shape_cast %390 : vector<1x8x8xbf16> to vector<8x8xbf16>
    %392 = arith.truncf %389 : vector<8x128xf32> to vector<8x128xbf16>
    %cst_190 = arith.constant dense<0.000000e+00> : vector<8x128xf32>
    %393 = tpu.matmul %391, %392, %cst_190 {dimension_numbers = #tpu.dot_dimension_numbers<[1], [0], [0], [1], [0, 0, 1, 1], [], []>} : vector<8x8xbf16>, vector<8x128xbf16>, vector<8x128xf32> -> vector<8x128xf32>
    %c8_i32_191 = arith.constant 8 : i32
    %394 = tpu.dynamic_rotate %386 by %c8_i32_191 dim 1 : vector<8x128xf32>, i32 -> vector<8x128xf32>
    %395 = vector.broadcast %1 : vector<1x128xf32> to vector<8x128xf32>
    %396 = arith.mulf %394, %395 : vector<8x128xf32>
    %c37 = arith.constant 37 : index
    %c0_192 = arith.constant 0 : index
    %c0_193 = arith.constant 0 : index
    %397 = vector.load %arg2[%c37, %c0_192, %c0_193] : memref<45x8x8xbf16, #tpu.memory_space<vmem>>, vector<1x8x8xbf16>
    %398 = vector.shape_cast %397 : vector<1x8x8xbf16> to vector<8x8xbf16>
    %399 = arith.truncf %396 : vector<8x128xf32> to vector<8x128xbf16>
    %cst_194 = arith.constant dense<0.000000e+00> : vector<8x128xf32>
    %400 = tpu.matmul %398, %399, %cst_194 {dimension_numbers = #tpu.dot_dimension_numbers<[1], [0], [0], [1], [0, 0, 1, 1], [], []>} : vector<8x8xbf16>, vector<8x128xbf16>, vector<8x128xf32> -> vector<8x128xf32>
    %401 = arith.addf %393, %400 : vector<8x128xf32>
    %c7_i32_195 = arith.constant 7 : i32
    %402 = tpu.dynamic_rotate %386 by %c7_i32_195 dim 1 : vector<8x128xf32>, i32 -> vector<8x128xf32>
    %403 = vector.broadcast %2 : vector<1x128xf32> to vector<8x128xf32>
    %404 = arith.mulf %402, %403 : vector<8x128xf32>
    %c38 = arith.constant 38 : index
    %c0_196 = arith.constant 0 : index
    %c0_197 = arith.constant 0 : index
    %405 = vector.load %arg2[%c38, %c0_196, %c0_197] : memref<45x8x8xbf16, #tpu.memory_space<vmem>>, vector<1x8x8xbf16>
    %406 = vector.shape_cast %405 : vector<1x8x8xbf16> to vector<8x8xbf16>
    %407 = arith.truncf %404 : vector<8x128xf32> to vector<8x128xbf16>
    %cst_198 = arith.constant dense<0.000000e+00> : vector<8x128xf32>
    %408 = tpu.matmul %406, %407, %cst_198 {dimension_numbers = #tpu.dot_dimension_numbers<[1], [0], [0], [1], [0, 0, 1, 1], [], []>} : vector<8x8xbf16>, vector<8x128xbf16>, vector<8x128xf32> -> vector<8x128xf32>
    %409 = arith.addf %401, %408 : vector<8x128xf32>
    %c1_i32_199 = arith.constant 1 : i32
    %410 = tpu.dynamic_rotate %386 by %c1_i32_199 dim 1 : vector<8x128xf32>, i32 -> vector<8x128xf32>
    %411 = vector.broadcast %3 : vector<1x128xf32> to vector<8x128xf32>
    %412 = arith.mulf %410, %411 : vector<8x128xf32>
    %c39 = arith.constant 39 : index
    %c0_200 = arith.constant 0 : index
    %c0_201 = arith.constant 0 : index
    %413 = vector.load %arg2[%c39, %c0_200, %c0_201] : memref<45x8x8xbf16, #tpu.memory_space<vmem>>, vector<1x8x8xbf16>
    %414 = vector.shape_cast %413 : vector<1x8x8xbf16> to vector<8x8xbf16>
    %415 = arith.truncf %412 : vector<8x128xf32> to vector<8x128xbf16>
    %cst_202 = arith.constant dense<0.000000e+00> : vector<8x128xf32>
    %416 = tpu.matmul %414, %415, %cst_202 {dimension_numbers = #tpu.dot_dimension_numbers<[1], [0], [0], [1], [0, 0, 1, 1], [], []>} : vector<8x8xbf16>, vector<8x128xbf16>, vector<8x128xf32> -> vector<8x128xf32>
    %417 = arith.addf %409, %416 : vector<8x128xf32>
    %c40 = arith.constant 40 : index
    %c0_203 = arith.constant 0 : index
    %c0_204 = arith.constant 0 : index
    %418 = vector.load %arg2[%c40, %c0_203, %c0_204] : memref<45x8x8xbf16, #tpu.memory_space<vmem>>, vector<1x8x8xbf16>
    %419 = vector.shape_cast %418 : vector<1x8x8xbf16> to vector<8x8xbf16>
    %420 = arith.truncf %386 : vector<8x128xf32> to vector<8x128xbf16>
    %cst_205 = arith.constant dense<0.000000e+00> : vector<8x128xf32>
    %421 = tpu.matmul %419, %420, %cst_205 {dimension_numbers = #tpu.dot_dimension_numbers<[1], [0], [0], [1], [0, 0, 1, 1], [], []>} : vector<8x8xbf16>, vector<8x128xbf16>, vector<8x128xf32> -> vector<8x128xf32>
    %422 = arith.addf %417, %421 : vector<8x128xf32>
    %c127_i32_206 = arith.constant 127 : i32
    %423 = tpu.dynamic_rotate %386 by %c127_i32_206 dim 1 : vector<8x128xf32>, i32 -> vector<8x128xf32>
    %424 = vector.broadcast %4 : vector<1x128xf32> to vector<8x128xf32>
    %425 = arith.mulf %423, %424 : vector<8x128xf32>
    %c41 = arith.constant 41 : index
    %c0_207 = arith.constant 0 : index
    %c0_208 = arith.constant 0 : index
    %426 = vector.load %arg2[%c41, %c0_207, %c0_208] : memref<45x8x8xbf16, #tpu.memory_space<vmem>>, vector<1x8x8xbf16>
    %427 = vector.shape_cast %426 : vector<1x8x8xbf16> to vector<8x8xbf16>
    %428 = arith.truncf %425 : vector<8x128xf32> to vector<8x128xbf16>
    %cst_209 = arith.constant dense<0.000000e+00> : vector<8x128xf32>
    %429 = tpu.matmul %427, %428, %cst_209 {dimension_numbers = #tpu.dot_dimension_numbers<[1], [0], [0], [1], [0, 0, 1, 1], [], []>} : vector<8x8xbf16>, vector<8x128xbf16>, vector<8x128xf32> -> vector<8x128xf32>
    %430 = arith.addf %422, %429 : vector<8x128xf32>
    %c121_i32_210 = arith.constant 121 : i32
    %431 = tpu.dynamic_rotate %386 by %c121_i32_210 dim 1 : vector<8x128xf32>, i32 -> vector<8x128xf32>
    %432 = vector.broadcast %5 : vector<1x128xf32> to vector<8x128xf32>
    %433 = arith.mulf %431, %432 : vector<8x128xf32>
    %c42 = arith.constant 42 : index
    %c0_211 = arith.constant 0 : index
    %c0_212 = arith.constant 0 : index
    %434 = vector.load %arg2[%c42, %c0_211, %c0_212] : memref<45x8x8xbf16, #tpu.memory_space<vmem>>, vector<1x8x8xbf16>
    %435 = vector.shape_cast %434 : vector<1x8x8xbf16> to vector<8x8xbf16>
    %436 = arith.truncf %433 : vector<8x128xf32> to vector<8x128xbf16>
    %cst_213 = arith.constant dense<0.000000e+00> : vector<8x128xf32>
    %437 = tpu.matmul %435, %436, %cst_213 {dimension_numbers = #tpu.dot_dimension_numbers<[1], [0], [0], [1], [0, 0, 1, 1], [], []>} : vector<8x8xbf16>, vector<8x128xbf16>, vector<8x128xf32> -> vector<8x128xf32>
    %438 = arith.addf %430, %437 : vector<8x128xf32>
    %c120_i32_214 = arith.constant 120 : i32
    %439 = tpu.dynamic_rotate %386 by %c120_i32_214 dim 1 : vector<8x128xf32>, i32 -> vector<8x128xf32>
    %440 = vector.broadcast %6 : vector<1x128xf32> to vector<8x128xf32>
    %441 = arith.mulf %439, %440 : vector<8x128xf32>
    %c43 = arith.constant 43 : index
    %c0_215 = arith.constant 0 : index
    %c0_216 = arith.constant 0 : index
    %442 = vector.load %arg2[%c43, %c0_215, %c0_216] : memref<45x8x8xbf16, #tpu.memory_space<vmem>>, vector<1x8x8xbf16>
    %443 = vector.shape_cast %442 : vector<1x8x8xbf16> to vector<8x8xbf16>
    %444 = arith.truncf %441 : vector<8x128xf32> to vector<8x128xbf16>
    %cst_217 = arith.constant dense<0.000000e+00> : vector<8x128xf32>
    %445 = tpu.matmul %443, %444, %cst_217 {dimension_numbers = #tpu.dot_dimension_numbers<[1], [0], [0], [1], [0, 0, 1, 1], [], []>} : vector<8x8xbf16>, vector<8x128xbf16>, vector<8x128xf32> -> vector<8x128xf32>
    %446 = arith.addf %438, %445 : vector<8x128xf32>
    %c119_i32_218 = arith.constant 119 : i32
    %447 = tpu.dynamic_rotate %386 by %c119_i32_218 dim 1 : vector<8x128xf32>, i32 -> vector<8x128xf32>
    %448 = vector.broadcast %7 : vector<1x128xf32> to vector<8x128xf32>
    %449 = arith.mulf %447, %448 : vector<8x128xf32>
    %c44 = arith.constant 44 : index
    %c0_219 = arith.constant 0 : index
    %c0_220 = arith.constant 0 : index
    %450 = vector.load %arg2[%c44, %c0_219, %c0_220] : memref<45x8x8xbf16, #tpu.memory_space<vmem>>, vector<1x8x8xbf16>
    %451 = vector.shape_cast %450 : vector<1x8x8xbf16> to vector<8x8xbf16>
    %452 = arith.truncf %449 : vector<8x128xf32> to vector<8x128xbf16>
    %cst_221 = arith.constant dense<0.000000e+00> : vector<8x128xf32>
    %453 = tpu.matmul %451, %452, %cst_221 {dimension_numbers = #tpu.dot_dimension_numbers<[1], [0], [0], [1], [0, 0, 1, 1], [], []>} : vector<8x8xbf16>, vector<8x128xbf16>, vector<8x128xf32> -> vector<8x128xf32>
    %454 = arith.addf %446, %453 : vector<8x128xf32>
    %c4_222 = arith.constant 4 : index
    %c0_223 = arith.constant 0 : index
    %c0_224 = arith.constant 0 : index
    %455 = vector.load %arg3[%c4_222, %c0_223, %c0_224] : memref<6x8x2xf32, #tpu.memory_space<vmem>>, vector<1x8x2xf32>
    %456 = vector.shape_cast %455 : vector<1x8x2xf32> to vector<8x2xf32>
    %457 = vector.extract_strided_slice %456 {offsets = [0, 0], sizes = [8, 1], strides = [1, 1]} : vector<8x2xf32> to vector<8x1xf32>
    %458 = vector.extract_strided_slice %456 {offsets = [0, 1], sizes = [8, 1], strides = [1, 1]} : vector<8x2xf32> to vector<8x1xf32>
    %cst_225 = arith.constant dense<0.000000e+00> : vector<8xf32>
    %459 = vector.multi_reduction <add>, %454, %cst_225 [1] : vector<8x128xf32> to vector<8xf32>
    %460 = vector.shape_cast %459 : vector<8xf32> to vector<8x1xf32>
    %cst_226 = arith.constant 7.812500e-03 : f32
    %461 = vector.broadcast %cst_226 : f32 to vector<8x1xf32>
    %462 = arith.mulf %460, %461 : vector<8x1xf32>
    %463 = vector.broadcast %462 : vector<8x1xf32> to vector<8x128xf32>
    %464 = arith.subf %454, %463 : vector<8x128xf32>
    %465 = arith.mulf %464, %464 : vector<8x128xf32>
    %cst_227 = arith.constant dense<0.000000e+00> : vector<8xf32>
    %466 = vector.multi_reduction <add>, %465, %cst_227 [1] : vector<8x128xf32> to vector<8xf32>
    %467 = vector.shape_cast %466 : vector<8xf32> to vector<8x1xf32>
    %cst_228 = arith.constant 7.812500e-03 : f32
    %468 = vector.broadcast %cst_228 : f32 to vector<8x1xf32>
    %469 = arith.mulf %467, %468 : vector<8x1xf32>
    %cst_229 = arith.constant 9.99999974E-6 : f32
    %470 = vector.broadcast %cst_229 : f32 to vector<8x1xf32>
    %471 = arith.addf %469, %470 : vector<8x1xf32>
    %472 = math.rsqrt %471 : vector<8x1xf32>
    %473 = vector.broadcast %472 : vector<8x1xf32> to vector<8x128xf32>
    %474 = arith.mulf %464, %473 : vector<8x128xf32>
    %475 = vector.broadcast %457 : vector<8x1xf32> to vector<8x128xf32>
    %476 = arith.mulf %474, %475 : vector<8x128xf32>
    %477 = vector.broadcast %458 : vector<8x1xf32> to vector<8x128xf32>
    %478 = arith.addf %476, %477 : vector<8x128xf32>
    %479 = arith.addf %478, %292 : vector<8x128xf32>
    %cst_230 = arith.constant 0.000000e+00 : f32
    %480 = vector.broadcast %cst_230 : f32 to vector<8x128xf32>
    %481 = arith.maximumf %479, %480 : vector<8x128xf32>
    %c0_231 = arith.constant 0 : index
    %c0_232 = arith.constant 0 : index
    %482 = vector.load %arg4[%c0_231, %c0_232] : memref<8x8xbf16, #tpu.memory_space<vmem>>, vector<8x8xbf16>
    %483 = arith.truncf %481 : vector<8x128xf32> to vector<8x128xbf16>
    %cst_233 = arith.constant dense<0.000000e+00> : vector<8x128xf32>
    %484 = tpu.matmul %482, %483, %cst_233 {dimension_numbers = #tpu.dot_dimension_numbers<[1], [0], [0], [1], [0, 0, 1, 1], [], []>} : vector<8x8xbf16>, vector<8x128xbf16>, vector<8x128xf32> -> vector<8x128xf32>
    %c5_234 = arith.constant 5 : index
    %c0_235 = arith.constant 0 : index
    %c0_236 = arith.constant 0 : index
    %485 = vector.load %arg3[%c5_234, %c0_235, %c0_236] : memref<6x8x2xf32, #tpu.memory_space<vmem>>, vector<1x8x2xf32>
    %486 = vector.shape_cast %485 : vector<1x8x2xf32> to vector<8x2xf32>
    %487 = vector.extract_strided_slice %486 {offsets = [0, 0], sizes = [8, 1], strides = [1, 1]} : vector<8x2xf32> to vector<8x1xf32>
    %488 = vector.extract_strided_slice %486 {offsets = [0, 1], sizes = [8, 1], strides = [1, 1]} : vector<8x2xf32> to vector<8x1xf32>
    %cst_237 = arith.constant dense<0.000000e+00> : vector<8xf32>
    %489 = vector.multi_reduction <add>, %484, %cst_237 [1] : vector<8x128xf32> to vector<8xf32>
    %490 = vector.shape_cast %489 : vector<8xf32> to vector<8x1xf32>
    %cst_238 = arith.constant 7.812500e-03 : f32
    %491 = vector.broadcast %cst_238 : f32 to vector<8x1xf32>
    %492 = arith.mulf %490, %491 : vector<8x1xf32>
    %493 = vector.broadcast %492 : vector<8x1xf32> to vector<8x128xf32>
    %494 = arith.subf %484, %493 : vector<8x128xf32>
    %495 = arith.mulf %494, %494 : vector<8x128xf32>
    %cst_239 = arith.constant dense<0.000000e+00> : vector<8xf32>
    %496 = vector.multi_reduction <add>, %495, %cst_239 [1] : vector<8x128xf32> to vector<8xf32>
    %497 = vector.shape_cast %496 : vector<8xf32> to vector<8x1xf32>
    %cst_240 = arith.constant 7.812500e-03 : f32
    %498 = vector.broadcast %cst_240 : f32 to vector<8x1xf32>
    %499 = arith.mulf %497, %498 : vector<8x1xf32>
    %cst_241 = arith.constant 9.99999974E-6 : f32
    %500 = vector.broadcast %cst_241 : f32 to vector<8x1xf32>
    %501 = arith.addf %499, %500 : vector<8x1xf32>
    %502 = math.rsqrt %501 : vector<8x1xf32>
    %503 = vector.broadcast %502 : vector<8x1xf32> to vector<8x128xf32>
    %504 = arith.mulf %494, %503 : vector<8x128xf32>
    %505 = vector.broadcast %487 : vector<8x1xf32> to vector<8x128xf32>
    %506 = arith.mulf %504, %505 : vector<8x128xf32>
    %507 = vector.broadcast %488 : vector<8x1xf32> to vector<8x128xf32>
    %508 = arith.addf %506, %507 : vector<8x128xf32>
    %cst_242 = arith.constant 0.000000e+00 : f32
    %509 = vector.broadcast %cst_242 : f32 to vector<8x128xf32>
    %510 = arith.maximumf %508, %509 : vector<8x128xf32>
    %511 = vector.extract_strided_slice %510 {offsets = [0, 0], sizes = [1, 128], strides = [1, 1]} : vector<8x128xf32> to vector<1x128xf32>
    %512 = vector.broadcast %511 : vector<1x128xf32> to vector<2x128xf32>
    %513 = arith.mulf %512, %8 : vector<2x128xf32>
    %514 = arith.truncf %513 : vector<2x128xf32> to vector<2x128xbf16>
    %515 = vector.extract_strided_slice %510 {offsets = [1, 0], sizes = [1, 128], strides = [1, 1]} : vector<8x128xf32> to vector<1x128xf32>
    %516 = vector.broadcast %515 : vector<1x128xf32> to vector<2x128xf32>
    %517 = arith.mulf %516, %8 : vector<2x128xf32>
    %518 = arith.truncf %517 : vector<2x128xf32> to vector<2x128xbf16>
    %519 = vector.extract_strided_slice %510 {offsets = [2, 0], sizes = [1, 128], strides = [1, 1]} : vector<8x128xf32> to vector<1x128xf32>
    %520 = vector.broadcast %519 : vector<1x128xf32> to vector<2x128xf32>
    %521 = arith.mulf %520, %8 : vector<2x128xf32>
    %522 = arith.truncf %521 : vector<2x128xf32> to vector<2x128xbf16>
    %c0_243 = arith.constant 0 : index
    %c0_244 = arith.constant 0 : index
    %523 = vector.load %arg5[%c0_243, %c0_244] : memref<640x256xbf16, #tpu.memory_space<vmem>>, vector<128x128xbf16>
    %c128 = arith.constant 128 : index
    %c0_245 = arith.constant 0 : index
    %524 = vector.load %arg5[%c128, %c0_245] : memref<640x256xbf16, #tpu.memory_space<vmem>>, vector<128x128xbf16>
    %c256 = arith.constant 256 : index
    %c0_246 = arith.constant 0 : index
    %525 = vector.load %arg5[%c256, %c0_246] : memref<640x256xbf16, #tpu.memory_space<vmem>>, vector<128x256xbf16>
    %c384 = arith.constant 384 : index
    %c0_247 = arith.constant 0 : index
    %526 = vector.load %arg5[%c384, %c0_247] : memref<640x256xbf16, #tpu.memory_space<vmem>>, vector<256x128xbf16>
    %cst_248 = arith.constant dense<0.000000e+00> : vector<2x128xf32>
    %527 = tpu.matmul %514, %523, %cst_248 {dimension_numbers = #tpu.dot_dimension_numbers<[1], [0], [0], [1], [0, 0, 1, 1], [], []>} : vector<2x128xbf16>, vector<128x128xbf16>, vector<2x128xf32> -> vector<2x128xf32>
    %cst_249 = arith.constant dense<0.000000e+00> : vector<2x128xf32>
    %528 = tpu.matmul %518, %524, %cst_249 {dimension_numbers = #tpu.dot_dimension_numbers<[1], [0], [0], [1], [0, 0, 1, 1], [], []>} : vector<2x128xbf16>, vector<128x128xbf16>, vector<2x128xf32> -> vector<2x128xf32>
    %529 = arith.addf %527, %528 : vector<2x128xf32>
    %c0_250 = arith.constant 0 : index
    %c0_251 = arith.constant 0 : index
    %530 = vector.load %arg6[%c0_250, %c0_251] : memref<3x256xf32, #tpu.memory_space<vmem>>, vector<1x128xf32>
    %531 = vector.broadcast %530 : vector<1x128xf32> to vector<2x128xf32>
    %532 = arith.addf %529, %531 : vector<2x128xf32>
    %c0_252 = arith.constant 0 : index
    %c0_253 = arith.constant 0 : index
    %533 = vector.load %arg7[%c0_252, %c0_253] : memref<2x128xf32, #tpu.memory_space<vmem>>, vector<2x128xf32>
    tpu.vector_store %arg7[%c0_252, %c0_253], %532 {strides = array<i32>} : memref<2x128xf32, #tpu.memory_space<vmem>>, vector<2x128xf32>,
    %cst_254 = arith.constant dense<0.000000e+00> : vector<2x256xf32>
    %534 = tpu.matmul %522, %525, %cst_254 {dimension_numbers = #tpu.dot_dimension_numbers<[1], [0], [0], [1], [0, 0, 1, 1], [], []>} : vector<2x128xbf16>, vector<128x256xbf16>, vector<2x256xf32> -> vector<2x256xf32>
    %c1_255 = arith.constant 1 : index
    %c0_256 = arith.constant 0 : index
    %535 = vector.load %arg6[%c1_255, %c0_256] : memref<3x256xf32, #tpu.memory_space<vmem>>, vector<1x256xf32>
    %536 = vector.broadcast %535 : vector<1x256xf32> to vector<2x256xf32>
    %537 = arith.addf %534, %536 : vector<2x256xf32>
    %cst_257 = arith.constant 0.000000e+00 : f32
    %538 = vector.broadcast %cst_257 : f32 to vector<2x256xf32>
    %539 = arith.maximumf %537, %538 : vector<2x256xf32>
    %540 = arith.truncf %539 : vector<2x256xf32> to vector<2x256xbf16>
    %cst_258 = arith.constant dense<0.000000e+00> : vector<2x128xf32>
    %541 = tpu.matmul %540, %526, %cst_258 {dimension_numbers = #tpu.dot_dimension_numbers<[1], [0], [0], [1], [0, 0, 1, 1], [], []>} : vector<2x256xbf16>, vector<256x128xbf16>, vector<2x128xf32> -> vector<2x128xf32>
    %c2_259 = arith.constant 2 : index
    %c0_260 = arith.constant 0 : index
    %542 = vector.load %arg6[%c2_259, %c0_260] : memref<3x256xf32, #tpu.memory_space<vmem>>, vector<1x128xf32>
    %543 = vector.broadcast %542 : vector<1x128xf32> to vector<2x128xf32>
    %544 = arith.addf %541, %543 : vector<2x128xf32>
    %545 = math.tanh %544 : vector<2x128xf32>
    %c0_261 = arith.constant 0 : index
    %c0_262 = arith.constant 0 : index
    %546 = vector.load %arg8[%c0_261, %c0_262] : memref<2x128xf32, #tpu.memory_space<vmem>>, vector<2x128xf32>
    tpu.vector_store %arg8[%c0_261, %c0_262], %545 {strides = array<i32>} : memref<2x128xf32, #tpu.memory_space<vmem>>, vector<2x128xf32>,
    return
  }
}

</mosaic_0001>

<llo_original>
// kernel: forward.1
$region0: #{forward.1}
  #allocation0 [shape = 'u32[]', space=smem, size = 0x4, offset = 0x4, fixed_abs, tag = 'smem constant byte address 0x4 - core index']
  #allocation1 [shape = 'u32[72,128]{1,0:T(1,128)}', space=vmem, size = 0x9000, scoped, tag = 'internal scratch']
  %s0 = inlined_call_operand.vmem [shape: f32[8,128], index: 0, kind: input, shape index: {}]
  %s1 = inlined_call_operand.vmem [shape: f32[18,128], index: 1, kind: input, shape index: {}]
  %s2 = inlined_call_operand.vmem [shape: bf16[45,8,8], index: 2, kind: input, shape index: {}]
  %s3 = inlined_call_operand.vmem [shape: f32[6,8,2], index: 3, kind: input, shape index: {}]
  %s4 = inlined_call_operand.vmem [shape: bf16[8,8], index: 4, kind: input, shape index: {}]
  %s5 = inlined_call_operand.hbm [shape: bf16[640,256], index: 5, kind: input, shape index: {}]
  %s6 = inlined_call_operand.vmem [shape: f32[3,256], index: 6, kind: input, shape index: {}]
  %s7 = inlined_call_operand.hbm [shape: f32[2,128], index: 7, kind: output, shape index: {0}]
  %s8 = inlined_call_operand.vmem [shape: f32[2,128], index: 8, kind: output, shape index: {1}]
  %9 = xla_tuple %s7, %s8
  %s10 = sld [smem:[#allocation0]]
  $region50: #{forward.1} parent=0
    _
  %s12 = ssub.s32 1, %s10
  %s13 = scalar_select 0, %s12, %s10
  $region1: #{forward.1} parent=0
    #allocation2 [shape = 'u8[327680]{0}', space=vmem, size = 0x50000, scoped, tag = 'input window, operand 5, single buffered']
    #allocation3 [shape = 's32[1]{0}', space=sflag, size = 0x4, scoped, tag = 'scoped memory for forward.1']
    #allocation4 [shape = 's32[1]{0}', space=sflag, size = 0x4, scoped, tag = 'scoped memory for forward.1']
    #allocation5 [shape = 'u8[1024]{0}', space=vmem, size = 0x400, scoped, tag = 'output window, operand 0, single buffered']
    %14 = vsyncpa [#allocation3], 0
    %15 = vsyncpa [#allocation4], 0
    // Predicated region
    $region2: #{forward.1} parent=1 // pred_check
      _
    $region3: #{forward.1} parent=1 // pred_check_branch
      %17 = sbr.rel (0) target = $region5
    $region4: #{forward.1} parent=1 // pred_region
      _
    $region5: #{forward.1} parent=1 // pred_fallthru
      _
    // Predicated region
    $region6: #{forward.1} parent=1 // pred_check
      _
    $region7: #{forward.1} parent=1 // pred_check_branch
      %19 = sbr.rel (0) target = $region9
    $region8: #{forward.1} parent=1 // pred_region
      _
    $region9: #{forward.1} parent=1 // pred_fallthru
      _
    // Predicated region
    $region10: #{forward.1} parent=1 // pred_check
      _
    $region11: #{forward.1} parent=1 // pred_check_branch
      %21 = sbr.rel (0) target = $region13
    $region12: #{forward.1} parent=1 // pred_region
      _
    $region13: #{forward.1} parent=1 // pred_fallthru
      _
    // Predicated region
    $region14: #{forward.1} parent=1 // pred_check
      _
    $region15: #{forward.1} parent=1 // pred_check_branch
      %23 = sbr.rel (0) target = $region17
    $region16: #{forward.1} parent=1 // pred_region
      _
    $region17: #{forward.1} parent=1 // pred_fallthru
      _
    // Predicated region
    $region18: #{forward.1} parent=1 // pred_check
      _
    $region19: #{forward.1} parent=1 // pred_check_branch
      %25 = sbr.rel (0) target = $region21
    $region20: #{forward.1} parent=1 // pred_region
      _
    $region21: #{forward.1} parent=1 // pred_fallthru
      _
    // Predicated region
    $region22: #{forward.1} parent=1 // pred_check
      _
    $region23: #{forward.1} parent=1 // pred_check_branch
      %27 = sbr.rel (0) target = $region25
    $region24: #{forward.1} parent=1 // pred_region
      %29 = vsyncadd [#allocation3], 0
      %s30 = sshll.u32 %s5, 4
      %s31 = int_to_ptr.hbm [resolvable:$true] %s30
      %s32 = sshll.u32 [#allocation2], 4
      %s33 = int_to_ptr.vmem [resolvable:$true] %s32
      %38 = dma.hbm_to_vmem [thread:$0]  %s31, 10240, %s33, [#allocation3], 128, 128, 8
    $region25: #{forward.1} parent=1 // pred_fallthru
      _
    // Predicated region
    $region26: #{forward.1} parent=1 // pred_check
      _
    $region27: #{forward.1} parent=1 // pred_check_branch
      %40 = sbr.rel (0) target = $region29
    $region28: #{forward.1} parent=1 // pred_region
      _
    $region29: #{forward.1} parent=1 // pred_fallthru
      _
    // Predicated region
    $region30: #{forward.1} parent=1 // pred_check
      _
    $region31: #{forward.1} parent=1 // pred_check_branch
      %42 = sbr.rel (0) target = $region33
    $region32: #{forward.1} parent=1 // pred_region
      %44 = dma.done [#allocation3], 10240
    $region33: #{forward.1} parent=1 // pred_fallthru
      _
    %v46 = vld [vmem:[%s1] sm:$0x1]
    %v47 = vld [vmem:[%s1 + $0x1] sm:$0x1]
    %v48 = vld [vmem:[%s1 + $0x2] sm:$0x1]
    %v49 = vld [vmem:[%s1 + $0x3] sm:$0x1]
    %v50 = vld [vmem:[%s1 + $0x5] sm:$0x1]
    %v51 = vld [vmem:[%s1 + $0x6] sm:$0x1]
    %v52 = vld [vmem:[%s1 + $0x7] sm:$0x1]
    %v53 = vld [vmem:[%s1 + $0x8] sm:$0x1]
    %v54 = vld [vmem:[%s1 + $0x10] sm:$0x3]
    %v55 = vld [vmem:[%s0] sm:$0xff]
    %56 = vrot.lane.b32.xlu0 %v55, 9
    %v57 = vpop.permute.xlu0 %56
    %v58 = vperm.slane %v46, 0
    %v59 = vmul.f32 %v57, %v58
    %v60 = vld [vmem:[%s2] sm:$0xf]
    %v61 = vpack.c.bf16 %v59, %v59
    %62 = vrot.lane.b32.xlu0 %v55, 8
    %v63 = vpop.permute.xlu0 %62
    %v64 = vperm.slane %v47, 0
    %v65 = vmul.f32 %v63, %v64
    %s66 = scalar_lea.vmem %s2, 4
    %v67 = vld [vmem:[%s66] sm:$0xf]
    %v68 = vpack.c.bf16 %v65, %v65
    %vm69 = vcmask 64512
    %v71 = vsel %vm69, %v67, 0
    %vm73 = vcmask 1043456
    %v75 = vsel %vm73, %v68, 0
    %77 = vmatpush.bf16.msra.mxu0 0
    %78 = vmatpush.bf16.msra.mxu0 0
    %79 = vmatpush.bf16.msra.mxu0 0
    %80 = vmatpush.bf16.msra.mxu0 0
    %81 = vmatpush.bf16.msra.mxu0 0
    %82 = vmatpush.bf16.msra.mxu0 0
    %83 = vmatpush.bf16.msra.mxu0 0
    %84 = vmatpush.bf16.msra.mxu0 %v75
    %85 = vmatmul.bf16.gmra.mxu0 %v71
    %v86 = vpop.f32.mrf.mxu0
    %v87 = vadd.f32 0.0, %v86
    %v88 = vpop.f32.mrf.mxu0
    %89 = vdwg.mxu0
    %v91 = vsel %vm69, %v60, 0
    %v94 = vsel %vm73, %v61, 0
    %96 = vmatpush.bf16.msra.mxu0 0
    %97 = vmatpush.bf16.msra.mxu0 0
    %98 = vmatpush.bf16.msra.mxu0 0
    %99 = vmatpush.bf16.msra.mxu0 0
    %100 = vmatpush.bf16.msra.mxu0 0
    %101 = vmatpush.bf16.msra.mxu0 0
    %102 = vmatpush.bf16.msra.mxu0 0
    %103 = vmatpush.bf16.msra.mxu0 %v94
    %104 = vmatmul.bf16.gmra.mxu0 %v91
    %v105 = vpop.f32.mrf.mxu0
    %v106 = vadd.f32 %v87, %v105
    %v107 = vpop.f32.mrf.mxu0
    %108 = vdwg.mxu0
    %109 = vrot.lane.b32.xlu0 %v55, 7
    %v110 = vpop.permute.xlu0 %109
    %v111 = vperm.slane %v48, 0
    %v112 = vmul.f32 %v110, %v111
    %s113 = scalar_lea.vmem %s2, 8
    %v114 = vld [vmem:[%s113] sm:$0xf]
    %v115 = vpack.c.bf16 %v112, %v112
    %v117 = vsel %vm69, %v114, 0
    %v120 = vsel %vm73, %v115, 0
    %122 = vmatpush.bf16.msra.mxu0 0
    %123 = vmatpush.bf16.msra.mxu0 0
    %124 = vmatpush.bf16.msra.mxu0 0
    %125 = vmatpush.bf16.msra.mxu0 0
    %126 = vmatpush.bf16.msra.mxu0 0
    %127 = vmatpush.bf16.msra.mxu0 0
    %128 = vmatpush.bf16.msra.mxu0 0
    %129 = vmatpush.bf16.msra.mxu0 %v120
    %130 = vmatmul.bf16.gmra.mxu0 %v117
    %v131 = vpop.f32.mrf.mxu0
    %v132 = vadd.f32 0.0, %v131
    %v133 = vpop.f32.mrf.mxu0
    %134 = vdwg.mxu0
    %v135 = vadd.f32 %v106, %v132
    %136 = vrot.lane.b32.xlu0 %v55, 1
    %v137 = vpop.permute.xlu0 %136
    %v138 = vperm.slane %v49, 0
    %v139 = vmul.f32 %v137, %v138
    %s140 = scalar_lea.vmem %s2, 12
    %v141 = vld [vmem:[%s140] sm:$0xf]
    %v142 = vpack.c.bf16 %v139, %v139
    %v144 = vsel %vm69, %v141, 0
    %v147 = vsel %vm73, %v142, 0
    %149 = vmatpush.bf16.msra.mxu0 0
    %150 = vmatpush.bf16.msra.mxu0 0
    %151 = vmatpush.bf16.msra.mxu0 0
    %152 = vmatpush.bf16.msra.mxu0 0
    %153 = vmatpush.bf16.msra.mxu0 0
    %154 = vmatpush.bf16.msra.mxu0 0
    %155 = vmatpush.bf16.msra.mxu0 0
    %156 = vmatpush.bf16.msra.mxu0 %v147
    %157 = vmatmul.bf16.gmra.mxu0 %v144
    %v158 = vpop.f32.mrf.mxu0
    %v159 = vadd.f32 0.0, %v158
    %v160 = vpop.f32.mrf.mxu0
    %161 = vdwg.mxu0
    %v162 = vadd.f32 %v135, %v159
    %s163 = scalar_lea.vmem %s2, 16
    %v164 = vld [vmem:[%s163] sm:$0xf]
    %v165 = vpack.c.bf16 %v55, %v55
    %v167 = vsel %vm69, %v164, 0
    %v170 = vsel %vm73, %v165, 0
    %172 = vmatpush.bf16.msra.mxu0 0
    %173 = vmatpush.bf16.msra.mxu0 0
    %174 = vmatpush.bf16.msra.mxu0 0
    %175 = vmatpush.bf16.msra.mxu0 0
    %176 = vmatpush.bf16.msra.mxu0 0
    %177 = vmatpush.bf16.msra.mxu0 0
    %178 = vmatpush.bf16.msra.mxu0 0
    %179 = vmatpush.bf16.msra.mxu0 %v170
    %180 = vmatmul.bf16.gmra.mxu0 %v167
    %v181 = vpop.f32.mrf.mxu0
    %v182 = vadd.f32 0.0, %v181
    %v183 = vpop.f32.mrf.mxu0
    %184 = vdwg.mxu0
    %v185 = vadd.f32 %v162, %v182
    %186 = vrot.lane.b32.xlu0 %v55, 127
    %v187 = vpop.permute.xlu0 %186
    %v188 = vperm.slane %v50, 0
    %v189 = vmul.f32 %v187, %v188
    %s190 = scalar_lea.vmem %s2, 20
    %v191 = vld [vmem:[%s190] sm:$0xf]
    %v192 = vpack.c.bf16 %v189, %v189
    %v194 = vsel %vm69, %v191, 0
    %v197 = vsel %vm73, %v192, 0
    %199 = vmatpush.bf16.msra.mxu0 0
    %200 = vmatpush.bf16.msra.mxu0 0
    %201 = vmatpush.bf16.msra.mxu0 0
    %202 = vmatpush.bf16.msra.mxu0 0
    %203 = vmatpush.bf16.msra.mxu0 0
    %204 = vmatpush.bf16.msra.mxu0 0
    %205 = vmatpush.bf16.msra.mxu0 0
    %206 = vmatpush.bf16.msra.mxu0 %v197
    %207 = vmatmul.bf16.gmra.mxu0 %v194
    %v208 = vpop.f32.mrf.mxu0
    %v209 = vadd.f32 0.0, %v208
    %v210 = vpop.f32.mrf.mxu0
    %211 = vdwg.mxu0
    %v212 = vadd.f32 %v185, %v209
    %213 = vrot.lane.b32.xlu0 %v55, 121
    %v214 = vpop.permute.xlu0 %213
    %v215 = vperm.slane %v51, 0
    %v216 = vmul.f32 %v214, %v215
    %s217 = scalar_lea.vmem %s2, 24
    %v218 = vld [vmem:[%s217] sm:$0xf]
    %v219 = vpack.c.bf16 %v216, %v216
    %v221 = vsel %vm69, %v218, 0
    %v224 = vsel %vm73, %v219, 0
    %226 = vmatpush.bf16.msra.mxu0 0
    %227 = vmatpush.bf16.msra.mxu0 0
    %228 = vmatpush.bf16.msra.mxu0 0
    %229 = vmatpush.bf16.msra.mxu0 0
    %230 = vmatpush.bf16.msra.mxu0 0
    %231 = vmatpush.bf16.msra.mxu0 0
    %232 = vmatpush.bf16.msra.mxu0 0
    %233 = vmatpush.bf16.msra.mxu0 %v224
    %234 = vmatmul.bf16.gmra.mxu0 %v221
    %v235 = vpop.f32.mrf.mxu0
    %v236 = vadd.f32 0.0, %v235
    %v237 = vpop.f32.mrf.mxu0
    %238 = vdwg.mxu0
    %v239 = vadd.f32 %v212, %v236
    %240 = vrot.lane.b32.xlu0 %v55, 120
    %v241 = vpop.permute.xlu0 %240
    %v242 = vperm.slane %v52, 0
    %v243 = vmul.f32 %v241, %v242
    %s244 = scalar_lea.vmem %s2, 28
    %v245 = vld [vmem:[%s244] sm:$0xf]
    %v246 = vpack.c.bf16 %v243, %v243
    %v248 = vsel %vm69, %v245, 0
    %v251 = vsel %vm73, %v246, 0
    %253 = vmatpush.bf16.msra.mxu0 0
    %254 = vmatpush.bf16.msra.mxu0 0
    %255 = vmatpush.bf16.msra.mxu0 0
    %256 = vmatpush.bf16.msra.mxu0 0
    %257 = vmatpush.bf16.msra.mxu0 0
    %258 = vmatpush.bf16.msra.mxu0 0
    %259 = vmatpush.bf16.msra.mxu0 0
    %260 = vmatpush.bf16.msra.mxu0 %v251
    %261 = vmatmul.bf16.gmra.mxu0 %v248
    %v262 = vpop.f32.mrf.mxu0
    %v263 = vadd.f32 0.0, %v262
    %v264 = vpop.f32.mrf.mxu0
    %265 = vdwg.mxu0
    %v266 = vadd.f32 %v239, %v263
    %267 = vrot.lane.b32.xlu0 %v55, 119
    %v268 = vpop.permute.xlu0 %267
    %v269 = vperm.slane %v53, 0
    %v270 = vmul.f32 %v268, %v269
    %s271 = scalar_lea.vmem %s2, 32
    %v272 = vld [vmem:[%s271] sm:$0xf]
    %v273 = vpack.c.bf16 %v270, %v270
    %v275 = vsel %vm69, %v272, 0
    %v278 = vsel %vm73, %v273, 0
    %280 = vmatpush.bf16.msra.mxu0 0
    %281 = vmatpush.bf16.msra.mxu0 0
    %282 = vmatpush.bf16.msra.mxu0 0
    %283 = vmatpush.bf16.msra.mxu0 0
    %284 = vmatpush.bf16.msra.mxu0 0
    %285 = vmatpush.bf16.msra.mxu0 0
    %286 = vmatpush.bf16.msra.mxu0 0
    %287 = vmatpush.bf16.msra.mxu0 %v278
    %288 = vmatmul.bf16.gmra.mxu0 %v275
    %v289 = vpop.f32.mrf.mxu0
    %v290 = vadd.f32 0.0, %v289
    %v291 = vpop.f32.mrf.mxu0
    %292 = vdwg.mxu0
    %v293 = vadd.f32 %v266, %v290
    %v294 = vld [vmem:[%s3] sm:$0xff]
    %295 = vadd.xlane.f32.xlu0 %v293
    %v296 = vpop.xlane.xlu0 %295
    %v297 = vmul.f32 %v296, 0.0078125
    %v298 = vsub.f32 %v293, %v297
    %v299 = vmul.f32 %v298, %v298
    %300 = vadd.xlane.f32.xlu0 %v299
    %v301 = vpop.xlane.xlu0 %300
    %v302 = vmul.f32 %v301, 0.0078125
    %v303 = vadd.f32 %v302, 1e-05
    %v304 = vrsqrt.pop %v303
    %v305 = vmul.f32 %v304, %v303
    %v306 = vmul.f32 %v305, %v304
    %v307 = vmul.f32 0.5, %v306
    %v308 = vsub.f32 1.5, %v307
    %v309 = vmul.f32 %v304, %v308
    %vm310 = vweird.f32 %v303
    %vm311 = vweird.f32 %v304
    %vm312 = vmor %vm310, %vm311
    %v313 = vsel %vm312, %v304, %v309
    %v314 = vmul.f32 %v298, %v313
    %316 = vset.pattern.permute.xlu0 0
    %317 = vperm.xlu0 %316, %v294
    %v318 = vpop.permute.xlu0 %317
    %v320 = vmul.f32 %v314, %v318
    %321 = vset.pattern.permute.xlu0 1
    %322 = vperm.xlu0 %321, %v294
    %v323 = vpop.permute.xlu0 %322
    %v325 = vadd.f32 %v320, %v323
    %v326 = vmax.f32 %v325, 0.0
    %327 = vrot.lane.b32.xlu0 %v326, 9
    %v328 = vpop.permute.xlu0 %327
    %v329 = vmul.f32 %v328, %v58
    %s330 = scalar_lea.vmem %s2, 36
    %v331 = vld [vmem:[%s330] sm:$0xf]
    %v332 = vpack.c.bf16 %v329, %v329
    %333 = vrot.lane.b32.xlu0 %v326, 8
    %v334 = vpop.permute.xlu0 %333
    %v335 = vmul.f32 %v334, %v64
    %s336 = scalar_lea.vmem %s2, 40
    %v337 = vld [vmem:[%s336] sm:$0xf]
    %v338 = vpack.c.bf16 %v335, %v335
    %v340 = vsel %vm69, %v337, 0
    %v343 = vsel %vm73, %v338, 0
    %345 = vmatpush.bf16.msra.mxu0 0
    %346 = vmatpush.bf16.msra.mxu0 0
    %347 = vmatpush.bf16.msra.mxu0 0
    %348 = vmatpush.bf16.msra.mxu0 0
    %349 = vmatpush.bf16.msra.mxu0 0
    %350 = vmatpush.bf16.msra.mxu0 0
    %351 = vmatpush.bf16.msra.mxu0 0
    %352 = vmatpush.bf16.msra.mxu0 %v343
    %353 = vmatmul.bf16.gmra.mxu0 %v340
    %v354 = vpop.f32.mrf.mxu0
    %v355 = vadd.f32 0.0, %v354
    %v356 = vpop.f32.mrf.mxu0
    %357 = vdwg.mxu0
    %v359 = vsel %vm69, %v331, 0
    %v362 = vsel %vm73, %v332, 0
    %364 = vmatpush.bf16.msra.mxu0 0
    %365 = vmatpush.bf16.msra.mxu0 0
    %366 = vmatpush.bf16.msra.mxu0 0
    %367 = vmatpush.bf16.msra.mxu0 0
    %368 = vmatpush.bf16.msra.mxu0 0
    %369 = vmatpush.bf16.msra.mxu0 0
    %370 = vmatpush.bf16.msra.mxu0 0
    %371 = vmatpush.bf16.msra.mxu0 %v362
    %372 = vmatmul.bf16.gmra.mxu0 %v359
    %v373 = vpop.f32.mrf.mxu0
    %v374 = vadd.f32 %v355, %v373
    %v375 = vpop.f32.mrf.mxu0
    %376 = vdwg.mxu0
    %377 = vrot.lane.b32.xlu0 %v326, 7
    %v378 = vpop.permute.xlu0 %377
    %v379 = vmul.f32 %v378, %v111
    %s380 = scalar_lea.vmem %s2, 44
    %v381 = vld [vmem:[%s380] sm:$0xf]
    %v382 = vpack.c.bf16 %v379, %v379
    %v384 = vsel %vm69, %v381, 0
    %v387 = vsel %vm73, %v382, 0
    %389 = vmatpush.bf16.msra.mxu0 0
    %390 = vmatpush.bf16.msra.mxu0 0
    %391 = vmatpush.bf16.msra.mxu0 0
    %392 = vmatpush.bf16.msra.mxu0 0
    %393 = vmatpush.bf16.msra.mxu0 0
    %394 = vmatpush.bf16.msra.mxu0 0
    %395 = vmatpush.bf16.msra.mxu0 0
    %396 = vmatpush.bf16.msra.mxu0 %v387
    %397 = vmatmul.bf16.gmra.mxu0 %v384
    %v398 = vpop.f32.mrf.mxu0
    %v399 = vadd.f32 0.0, %v398
    %v400 = vpop.f32.mrf.mxu0
    %401 = vdwg.mxu0
    %v402 = vadd.f32 %v374, %v399
    %403 = vrot.lane.b32.xlu0 %v326, 1
    %v404 = vpop.permute.xlu0 %403
    %v405 = vmul.f32 %v404, %v138
    %s406 = scalar_lea.vmem %s2, 48
    %v407 = vld [vmem:[%s406] sm:$0xf]
    %v408 = vpack.c.bf16 %v405, %v405
    %v410 = vsel %vm69, %v407, 0
    %v413 = vsel %vm73, %v408, 0
    %415 = vmatpush.bf16.msra.mxu0 0
    %416 = vmatpush.bf16.msra.mxu0 0
    %417 = vmatpush.bf16.msra.mxu0 0
    %418 = vmatpush.bf16.msra.mxu0 0
    %419 = vmatpush.bf16.msra.mxu0 0
    %420 = vmatpush.bf16.msra.mxu0 0
    %421 = vmatpush.bf16.msra.mxu0 0
    %422 = vmatpush.bf16.msra.mxu0 %v413
    %423 = vmatmul.bf16.gmra.mxu0 %v410
    %v424 = vpop.f32.mrf.mxu0
    %v425 = vadd.f32 0.0, %v424
    %v426 = vpop.f32.mrf.mxu0
    %427 = vdwg.mxu0
    %v428 = vadd.f32 %v402, %v425
    %s429 = scalar_lea.vmem %s2, 52
    %v430 = vld [vmem:[%s429] sm:$0xf]
    %v431 = vpack.c.bf16 %v326, %v326
    %v433 = vsel %vm69, %v430, 0
    %v436 = vsel %vm73, %v431, 0
    %438 = vmatpush.bf16.msra.mxu0 0
    %439 = vmatpush.bf16.msra.mxu0 0
    %440 = vmatpush.bf16.msra.mxu0 0
    %441 = vmatpush.bf16.msra.mxu0 0
    %442 = vmatpush.bf16.msra.mxu0 0
    %443 = vmatpush.bf16.msra.mxu0 0
    %444 = vmatpush.bf16.msra.mxu0 0
    %445 = vmatpush.bf16.msra.mxu0 %v436
    %446 = vmatmul.bf16.gmra.mxu0 %v433
    %v447 = vpop.f32.mrf.mxu0
    %v448 = vadd.f32 0.0, %v447
    %v449 = vpop.f32.mrf.mxu0
    %450 = vdwg.mxu0
    %v451 = vadd.f32 %v428, %v448
    %452 = vrot.lane.b32.xlu0 %v326, 127
    %v453 = vpop.permute.xlu0 %452
    %v454 = vmul.f32 %v453, %v188
    %s455 = scalar_lea.vmem %s2, 56
    %v456 = vld [vmem:[%s455] sm:$0xf]
    %v457 = vpack.c.bf16 %v454, %v454
    %v459 = vsel %vm69, %v456, 0
    %v462 = vsel %vm73, %v457, 0
    %464 = vmatpush.bf16.msra.mxu0 0
    %465 = vmatpush.bf16.msra.mxu0 0
    %466 = vmatpush.bf16.msra.mxu0 0
    %467 = vmatpush.bf16.msra.mxu0 0
    %468 = vmatpush.bf16.msra.mxu0 0
    %469 = vmatpush.bf16.msra.mxu0 0
    %470 = vmatpush.bf16.msra.mxu0 0
    %471 = vmatpush.bf16.msra.mxu0 %v462
    %472 = vmatmul.bf16.gmra.mxu0 %v459
    %v473 = vpop.f32.mrf.mxu0
    %v474 = vadd.f32 0.0, %v473
    %v475 = vpop.f32.mrf.mxu0
    %476 = vdwg.mxu0
    %v477 = vadd.f32 %v451, %v474
    %478 = vrot.lane.b32.xlu0 %v326, 121
    %v479 = vpop.permute.xlu0 %478
    %v480 = vmul.f32 %v479, %v215
    %s481 = scalar_lea.vmem %s2, 60
    %v482 = vld [vmem:[%s481] sm:$0xf]
    %v483 = vpack.c.bf16 %v480, %v480
    %v485 = vsel %vm69, %v482, 0
    %v488 = vsel %vm73, %v483, 0
    %490 = vmatpush.bf16.msra.mxu0 0
    %491 = vmatpush.bf16.msra.mxu0 0
    %492 = vmatpush.bf16.msra.mxu0 0
    %493 = vmatpush.bf16.msra.mxu0 0
    %494 = vmatpush.bf16.msra.mxu0 0
    %495 = vmatpush.bf16.msra.mxu0 0
    %496 = vmatpush.bf16.msra.mxu0 0
    %497 = vmatpush.bf16.msra.mxu0 %v488
    %498 = vmatmul.bf16.gmra.mxu0 %v485
    %v499 = vpop.f32.mrf.mxu0
    %v500 = vadd.f32 0.0, %v499
    %v501 = vpop.f32.mrf.mxu0
    %502 = vdwg.mxu0
    %v503 = vadd.f32 %v477, %v500
    %504 = vrot.lane.b32.xlu0 %v326, 120
    %v505 = vpop.permute.xlu0 %504
    %v506 = vmul.f32 %v505, %v242
    %s507 = scalar_lea.vmem %s2, 64
    %v508 = vld [vmem:[%s507] sm:$0xf]
    %v509 = vpack.c.bf16 %v506, %v506
    %v511 = vsel %vm69, %v508, 0
    %v514 = vsel %vm73, %v509, 0
    %516 = vmatpush.bf16.msra.mxu0 0
    %517 = vmatpush.bf16.msra.mxu0 0
    %518 = vmatpush.bf16.msra.mxu0 0
    %519 = vmatpush.bf16.msra.mxu0 0
    %520 = vmatpush.bf16.msra.mxu0 0
    %521 = vmatpush.bf16.msra.mxu0 0
    %522 = vmatpush.bf16.msra.mxu0 0
    %523 = vmatpush.bf16.msra.mxu0 %v514
    %524 = vmatmul.bf16.gmra.mxu0 %v511
    %v525 = vpop.f32.mrf.mxu0
    %v526 = vadd.f32 0.0, %v525
    %v527 = vpop.f32.mrf.mxu0
    %528 = vdwg.mxu0
    %v529 = vadd.f32 %v503, %v526
    %530 = vrot.lane.b32.xlu0 %v326, 119
    %v531 = vpop.permute.xlu0 %530
    %v532 = vmul.f32 %v531, %v269
    %s533 = scalar_lea.vmem %s2, 68
    %v534 = vld [vmem:[%s533] sm:$0xf]
    %v535 = vpack.c.bf16 %v532, %v532
    %v537 = vsel %vm69, %v534, 0
    %v540 = vsel %vm73, %v535, 0
    %542 = vmatpush.bf16.msra.mxu0 0
    %543 = vmatpush.bf16.msra.mxu0 0
    %544 = vmatpush.bf16.msra.mxu0 0
    %545 = vmatpush.bf16.msra.mxu0 0
    %546 = vmatpush.bf16.msra.mxu0 0
    %547 = vmatpush.bf16.msra.mxu0 0
    %548 = vmatpush.bf16.msra.mxu0 0
    %549 = vmatpush.bf16.msra.mxu0 %v540
    %550 = vmatmul.bf16.gmra.mxu0 %v537
    %v551 = vpop.f32.mrf.mxu0
    %v552 = vadd.f32 0.0, %v551
    %v553 = vpop.f32.mrf.mxu0
    %554 = vdwg.mxu0
    %v555 = vadd.f32 %v529, %v552
    %s556 = scalar_lea.vmem %s3, 8
    %v557 = vld [vmem:[%s556] sm:$0xff]
    %558 = vadd.xlane.f32.xlu0 %v555
    %v559 = vpop.xlane.xlu0 %558
    %v560 = vmul.f32 %v559, 0.0078125
    %v561 = vsub.f32 %v555, %v560
    %v562 = vmul.f32 %v561, %v561
    %563 = vadd.xlane.f32.xlu0 %v562
    %v564 = vpop.xlane.xlu0 %563
    %v565 = vmul.f32 %v564, 0.0078125
    %v566 = vadd.f32 %v565, 1e-05
    %v567 = vrsqrt.pop %v566
    %v568 = vmul.f32 %v567, %v566
    %v569 = vmul.f32 %v568, %v567
    %v570 = vmul.f32 0.5, %v569
    %v571 = vsub.f32 1.5, %v570
    %v572 = vmul.f32 %v567, %v571
    %vm573 = vweird.f32 %v566
    %vm574 = vweird.f32 %v567
    %vm575 = vmor %vm573, %vm574
    %v576 = vsel %vm575, %v567, %v572
    %v577 = vmul.f32 %v561, %v576
    %579 = vset.pattern.permute.xlu0 0
    %580 = vperm.xlu0 %579, %v557
    %v581 = vpop.permute.xlu0 %580
    %v583 = vmul.f32 %v577, %v581
    %584 = vset.pattern.permute.xlu0 1
    %585 = vperm.xlu0 %584, %v557
    %v586 = vpop.permute.xlu0 %585
    %v588 = vadd.f32 %v583, %v586
    %v589 = vmax.f32 %v588, 0.0
    %590 = vrot.lane.b32.xlu0 %v589, 9
    %v591 = vpop.permute.xlu0 %590
    %v592 = vmul.f32 %v591, %v58
    %s593 = scalar_lea.vmem %s2, 72
    %v594 = vld [vmem:[%s593] sm:$0xf]
    %v595 = vpack.c.bf16 %v592, %v592
    %596 = vrot.lane.b32.xlu0 %v589, 8
    %v597 = vpop.permute.xlu0 %596
    %v598 = vmul.f32 %v597, %v64
    %s599 = scalar_lea.vmem %s2, 76
    %v600 = vld [vmem:[%s599] sm:$0xf]
    %v601 = vpack.c.bf16 %v598, %v598
    %v603 = vsel %vm69, %v600, 0
    %v606 = vsel %vm73, %v601, 0
    %608 = vmatpush.bf16.msra.mxu0 0
    %609 = vmatpush.bf16.msra.mxu0 0
    %610 = vmatpush.bf16.msra.mxu0 0
    %611 = vmatpush.bf16.msra.mxu0 0
    %612 = vmatpush.bf16.msra.mxu0 0
    %613 = vmatpush.bf16.msra.mxu0 0
    %614 = vmatpush.bf16.msra.mxu0 0
    %615 = vmatpush.bf16.msra.mxu0 %v606
    %616 = vmatmul.bf16.gmra.mxu0 %v603
    %v617 = vpop.f32.mrf.mxu0
    %v618 = vadd.f32 0.0, %v617
    %v619 = vpop.f32.mrf.mxu0
    %620 = vdwg.mxu0
    %v622 = vsel %vm69, %v594, 0
    %v625 = vsel %vm73, %v595, 0
    %627 = vmatpush.bf16.msra.mxu0 0
    %628 = vmatpush.bf16.msra.mxu0 0
    %629 = vmatpush.bf16.msra.mxu0 0
    %630 = vmatpush.bf16.msra.mxu0 0
    %631 = vmatpush.bf16.msra.mxu0 0
    %632 = vmatpush.bf16.msra.mxu0 0
    %633 = vmatpush.bf16.msra.mxu0 0
    %634 = vmatpush.bf16.msra.mxu0 %v625
    %635 = vmatmul.bf16.gmra.mxu0 %v622
    %v636 = vpop.f32.mrf.mxu0
    %v637 = vadd.f32 %v618, %v636
    %v638 = vpop.f32.mrf.mxu0
    %639 = vdwg.mxu0
    %640 = vrot.lane.b32.xlu0 %v589, 7
    %v641 = vpop.permute.xlu0 %640
    %v642 = vmul.f32 %v641, %v111
    %s643 = scalar_lea.vmem %s2, 80
    %v644 = vld [vmem:[%s643] sm:$0xf]
    %v645 = vpack.c.bf16 %v642, %v642
    %v647 = vsel %vm69, %v644, 0
    %v650 = vsel %vm73, %v645, 0
    %652 = vmatpush.bf16.msra.mxu0 0
    %653 = vmatpush.bf16.msra.mxu0 0
    %654 = vmatpush.bf16.msra.mxu0 0
    %655 = vmatpush.bf16.msra.mxu0 0
    %656 = vmatpush.bf16.msra.mxu0 0
    %657 = vmatpush.bf16.msra.mxu0 0
    %658 = vmatpush.bf16.msra.mxu0 0
    %659 = vmatpush.bf16.msra.mxu0 %v650
    %660 = vmatmul.bf16.gmra.mxu0 %v647
    %v661 = vpop.f32.mrf.mxu0
    %v662 = vadd.f32 0.0, %v661
    %v663 = vpop.f32.mrf.mxu0
    %664 = vdwg.mxu0
    %v665 = vadd.f32 %v637, %v662
    %666 = vrot.lane.b32.xlu0 %v589, 1
    %v667 = vpop.permute.xlu0 %666
    %v668 = vmul.f32 %v667, %v138
    %s669 = scalar_lea.vmem %s2, 84
    %v670 = vld [vmem:[%s669] sm:$0xf]
    %v671 = vpack.c.bf16 %v668, %v668
    %v673 = vsel %vm69, %v670, 0
    %v676 = vsel %vm73, %v671, 0
    %678 = vmatpush.bf16.msra.mxu0 0
    %679 = vmatpush.bf16.msra.mxu0 0
    %680 = vmatpush.bf16.msra.mxu0 0
    %681 = vmatpush.bf16.msra.mxu0 0
    %682 = vmatpush.bf16.msra.mxu0 0
    %683 = vmatpush.bf16.msra.mxu0 0
    %684 = vmatpush.bf16.msra.mxu0 0
    %685 = vmatpush.bf16.msra.mxu0 %v676
    %686 = vmatmul.bf16.gmra.mxu0 %v673
    %v687 = vpop.f32.mrf.mxu0
    %v688 = vadd.f32 0.0, %v687
    %v689 = vpop.f32.mrf.mxu0
    %690 = vdwg.mxu0
    %v691 = vadd.f32 %v665, %v688
    %s692 = scalar_lea.vmem %s2, 88
    %v693 = vld [vmem:[%s692] sm:$0xf]
    %v694 = vpack.c.bf16 %v589, %v589
    %v696 = vsel %vm69, %v693, 0
    %v699 = vsel %vm73, %v694, 0
    %701 = vmatpush.bf16.msra.mxu0 0
    %702 = vmatpush.bf16.msra.mxu0 0
    %703 = vmatpush.bf16.msra.mxu0 0
    %704 = vmatpush.bf16.msra.mxu0 0
    %705 = vmatpush.bf16.msra.mxu0 0
    %706 = vmatpush.bf16.msra.mxu0 0
    %707 = vmatpush.bf16.msra.mxu0 0
    %708 = vmatpush.bf16.msra.mxu0 %v699
    %709 = vmatmul.bf16.gmra.mxu0 %v696
    %v710 = vpop.f32.mrf.mxu0
    %v711 = vadd.f32 0.0, %v710
    %v712 = vpop.f32.mrf.mxu0
    %713 = vdwg.mxu0
    %v714 = vadd.f32 %v691, %v711
    %715 = vrot.lane.b32.xlu0 %v589, 127
    %v716 = vpop.permute.xlu0 %715
    %v717 = vmul.f32 %v716, %v188
    %s718 = scalar_lea.vmem %s2, 92
    %v719 = vld [vmem:[%s718] sm:$0xf]
    %v720 = vpack.c.bf16 %v717, %v717
    %v722 = vsel %vm69, %v719, 0
    %v725 = vsel %vm73, %v720, 0
    %727 = vmatpush.bf16.msra.mxu0 0
    %728 = vmatpush.bf16.msra.mxu0 0
    %729 = vmatpush.bf16.msra.mxu0 0
    %730 = vmatpush.bf16.msra.mxu0 0
    %731 = vmatpush.bf16.msra.mxu0 0
    %732 = vmatpush.bf16.msra.mxu0 0
    %733 = vmatpush.bf16.msra.mxu0 0
    %734 = vmatpush.bf16.msra.mxu0 %v725
    %735 = vmatmul.bf16.gmra.mxu0 %v722
    %v736 = vpop.f32.mrf.mxu0
    %v737 = vadd.f32 0.0, %v736
    %v738 = vpop.f32.mrf.mxu0
    %739 = vdwg.mxu0
    %v740 = vadd.f32 %v714, %v737
    %741 = vrot.lane.b32.xlu0 %v589, 121
    %v742 = vpop.permute.xlu0 %741
    %v743 = vmul.f32 %v742, %v215
    %s744 = scalar_lea.vmem %s2, 96
    %v745 = vld [vmem:[%s744] sm:$0xf]
    %v746 = vpack.c.bf16 %v743, %v743
    %v748 = vsel %vm69, %v745, 0
    %v751 = vsel %vm73, %v746, 0
    %753 = vmatpush.bf16.msra.mxu0 0
    %754 = vmatpush.bf16.msra.mxu0 0
    %755 = vmatpush.bf16.msra.mxu0 0
    %756 = vmatpush.bf16.msra.mxu0 0
    %757 = vmatpush.bf16.msra.mxu0 0
    %758 = vmatpush.bf16.msra.mxu0 0
    %759 = vmatpush.bf16.msra.mxu0 0
    %760 = vmatpush.bf16.msra.mxu0 %v751
    %761 = vmatmul.bf16.gmra.mxu0 %v748
    %v762 = vpop.f32.mrf.mxu0
    %v763 = vadd.f32 0.0, %v762
    %v764 = vpop.f32.mrf.mxu0
    %765 = vdwg.mxu0
    %v766 = vadd.f32 %v740, %v763
    %767 = vrot.lane.b32.xlu0 %v589, 120
    %v768 = vpop.permute.xlu0 %767
    %v769 = vmul.f32 %v768, %v242
    %s770 = scalar_lea.vmem %s2, 100
    %v771 = vld [vmem:[%s770] sm:$0xf]
    %v772 = vpack.c.bf16 %v769, %v769
    %v774 = vsel %vm69, %v771, 0
    %v777 = vsel %vm73, %v772, 0
    %779 = vmatpush.bf16.msra.mxu0 0
    %780 = vmatpush.bf16.msra.mxu0 0
    %781 = vmatpush.bf16.msra.mxu0 0
    %782 = vmatpush.bf16.msra.mxu0 0
    %783 = vmatpush.bf16.msra.mxu0 0
    %784 = vmatpush.bf16.msra.mxu0 0
    %785 = vmatpush.bf16.msra.mxu0 0
    %786 = vmatpush.bf16.msra.mxu0 %v777
    %787 = vmatmul.bf16.gmra.mxu0 %v774
    %v788 = vpop.f32.mrf.mxu0
    %v789 = vadd.f32 0.0, %v788
    %v790 = vpop.f32.mrf.mxu0
    %791 = vdwg.mxu0
    %v792 = vadd.f32 %v766, %v789
    %793 = vrot.lane.b32.xlu0 %v589, 119
    %v794 = vpop.permute.xlu0 %793
    %v795 = vmul.f32 %v794, %v269
    %s796 = scalar_lea.vmem %s2, 104
    %v797 = vld [vmem:[%s796] sm:$0xf]
    %v798 = vpack.c.bf16 %v795, %v795
    %v800 = vsel %vm69, %v797, 0
    %v803 = vsel %vm73, %v798, 0
    %805 = vmatpush.bf16.msra.mxu0 0
    %806 = vmatpush.bf16.msra.mxu0 0
    %807 = vmatpush.bf16.msra.mxu0 0
    %808 = vmatpush.bf16.msra.mxu0 0
    %809 = vmatpush.bf16.msra.mxu0 0
    %810 = vmatpush.bf16.msra.mxu0 0
    %811 = vmatpush.bf16.msra.mxu0 0
    %812 = vmatpush.bf16.msra.mxu0 %v803
    %813 = vmatmul.bf16.gmra.mxu0 %v800
    %v814 = vpop.f32.mrf.mxu0
    %v815 = vadd.f32 0.0, %v814
    %v816 = vpop.f32.mrf.mxu0
    %817 = vdwg.mxu0
    %v818 = vadd.f32 %v792, %v815
    %s819 = scalar_lea.vmem %s3, 16
    %v820 = vld [vmem:[%s819] sm:$0xff]
    %821 = vadd.xlane.f32.xlu0 %v818
    %v822 = vpop.xlane.xlu0 %821
    %v823 = vmul.f32 %v822, 0.0078125
    %v824 = vsub.f32 %v818, %v823
    %v825 = vmul.f32 %v824, %v824
    %826 = vadd.xlane.f32.xlu0 %v825
    %v827 = vpop.xlane.xlu0 %826
    %v828 = vmul.f32 %v827, 0.0078125
    %v829 = vadd.f32 %v828, 1e-05
    %v830 = vrsqrt.pop %v829
    %v831 = vmul.f32 %v830, %v829
    %v832 = vmul.f32 %v831, %v830
    %v833 = vmul.f32 0.5, %v832
    %v834 = vsub.f32 1.5, %v833
    %v835 = vmul.f32 %v830, %v834
    %vm836 = vweird.f32 %v829
    %vm837 = vweird.f32 %v830
    %vm838 = vmor %vm836, %vm837
    %v839 = vsel %vm838, %v830, %v835
    %v840 = vmul.f32 %v824, %v839
    %842 = vset.pattern.permute.xlu0 0
    %843 = vperm.xlu0 %842, %v820
    %v844 = vpop.permute.xlu0 %843
    %v846 = vmul.f32 %v840, %v844
    %847 = vset.pattern.permute.xlu0 1
    %848 = vperm.xlu0 %847, %v820
    %v849 = vpop.permute.xlu0 %848
    %v851 = vadd.f32 %v846, %v849
    %v852 = vadd.f32 %v851, %v326
    %v853 = vmax.f32 %v852, 0.0
    %854 = vrot.lane.b32.xlu0 %v853, 9
    %v855 = vpop.permute.xlu0 %854
    %v856 = vmul.f32 %v855, %v58
    %s857 = scalar_lea.vmem %s2, 108
    %v858 = vld [vmem:[%s857] sm:$0xf]
    %v859 = vpack.c.bf16 %v856, %v856
    %860 = vrot.lane.b32.xlu0 %v853, 8
    %v861 = vpop.permute.xlu0 %860
    %v862 = vmul.f32 %v861, %v64
    %s863 = scalar_lea.vmem %s2, 112
    %v864 = vld [vmem:[%s863] sm:$0xf]
    %v865 = vpack.c.bf16 %v862, %v862
    %v867 = vsel %vm69, %v864, 0
    %v870 = vsel %vm73, %v865, 0
    %872 = vmatpush.bf16.msra.mxu0 0
    %873 = vmatpush.bf16.msra.mxu0 0
    %874 = vmatpush.bf16.msra.mxu0 0
    %875 = vmatpush.bf16.msra.mxu0 0
    %876 = vmatpush.bf16.msra.mxu0 0
    %877 = vmatpush.bf16.msra.mxu0 0
    %878 = vmatpush.bf16.msra.mxu0 0
    %879 = vmatpush.bf16.msra.mxu0 %v870
    %880 = vmatmul.bf16.gmra.mxu0 %v867
    %v881 = vpop.f32.mrf.mxu0
    %v882 = vadd.f32 0.0, %v881
    %v883 = vpop.f32.mrf.mxu0
    %884 = vdwg.mxu0
    %v886 = vsel %vm69, %v858, 0
    %v889 = vsel %vm73, %v859, 0
    %891 = vmatpush.bf16.msra.mxu0 0
    %892 = vmatpush.bf16.msra.mxu0 0
    %893 = vmatpush.bf16.msra.mxu0 0
    %894 = vmatpush.bf16.msra.mxu0 0
    %895 = vmatpush.bf16.msra.mxu0 0
    %896 = vmatpush.bf16.msra.mxu0 0
    %897 = vmatpush.bf16.msra.mxu0 0
    %898 = vmatpush.bf16.msra.mxu0 %v889
    %899 = vmatmul.bf16.gmra.mxu0 %v886
    %v900 = vpop.f32.mrf.mxu0
    %v901 = vadd.f32 %v882, %v900
    %v902 = vpop.f32.mrf.mxu0
    %903 = vdwg.mxu0
    %904 = vrot.lane.b32.xlu0 %v853, 7
    %v905 = vpop.permute.xlu0 %904
    %v906 = vmul.f32 %v905, %v111
    %s907 = scalar_lea.vmem %s2, 116
    %v908 = vld [vmem:[%s907] sm:$0xf]
    %v909 = vpack.c.bf16 %v906, %v906
    %v911 = vsel %vm69, %v908, 0
    %v914 = vsel %vm73, %v909, 0
    %916 = vmatpush.bf16.msra.mxu0 0
    %917 = vmatpush.bf16.msra.mxu0 0
    %918 = vmatpush.bf16.msra.mxu0 0
    %919 = vmatpush.bf16.msra.mxu0 0
    %920 = vmatpush.bf16.msra.mxu0 0
    %921 = vmatpush.bf16.msra.mxu0 0
    %922 = vmatpush.bf16.msra.mxu0 0
    %923 = vmatpush.bf16.msra.mxu0 %v914
    %924 = vmatmul.bf16.gmra.mxu0 %v911
    %v925 = vpop.f32.mrf.mxu0
    %v926 = vadd.f32 0.0, %v925
    %v927 = vpop.f32.mrf.mxu0
    %928 = vdwg.mxu0
    %v929 = vadd.f32 %v901, %v926
    %930 = vrot.lane.b32.xlu0 %v853, 1
    %v931 = vpop.permute.xlu0 %930
    %v932 = vmul.f32 %v931, %v138
    %s933 = scalar_lea.vmem %s2, 120
    %v934 = vld [vmem:[%s933] sm:$0xf]
    %v935 = vpack.c.bf16 %v932, %v932
    %v937 = vsel %vm69, %v934, 0
    %v940 = vsel %vm73, %v935, 0
    %942 = vmatpush.bf16.msra.mxu0 0
    %943 = vmatpush.bf16.msra.mxu0 0
    %944 = vmatpush.bf16.msra.mxu0 0
    %945 = vmatpush.bf16.msra.mxu0 0
    %946 = vmatpush.bf16.msra.mxu0 0
    %947 = vmatpush.bf16.msra.mxu0 0
    %948 = vmatpush.bf16.msra.mxu0 0
    %949 = vmatpush.bf16.msra.mxu0 %v940
    %950 = vmatmul.bf16.gmra.mxu0 %v937
    %v951 = vpop.f32.mrf.mxu0
    %v952 = vadd.f32 0.0, %v951
    %v953 = vpop.f32.mrf.mxu0
    %954 = vdwg.mxu0
    %v955 = vadd.f32 %v929, %v952
    %s956 = scalar_lea.vmem %s2, 124
    %v957 = vld [vmem:[%s956] sm:$0xf]
    %v958 = vpack.c.bf16 %v853, %v853
    %v960 = vsel %vm69, %v957, 0
    %v963 = vsel %vm73, %v958, 0
    %965 = vmatpush.bf16.msra.mxu0 0
    %966 = vmatpush.bf16.msra.mxu0 0
    %967 = vmatpush.bf16.msra.mxu0 0
    %968 = vmatpush.bf16.msra.mxu0 0
    %969 = vmatpush.bf16.msra.mxu0 0
    %970 = vmatpush.bf16.msra.mxu0 0
    %971 = vmatpush.bf16.msra.mxu0 0
    %972 = vmatpush.bf16.msra.mxu0 %v963
    %973 = vmatmul.bf16.gmra.mxu0 %v960
    %v974 = vpop.f32.mrf.mxu0
    %v975 = vadd.f32 0.0, %v974
    %v976 = vpop.f32.mrf.mxu0
    %977 = vdwg.mxu0
    %v978 = vadd.f32 %v955, %v975
    %979 = vrot.lane.b32.xlu0 %v853, 127
    %v980 = vpop.permute.xlu0 %979
    %v981 = vmul.f32 %v980, %v188
    %s982 = scalar_lea.vmem %s2, 128
    %v983 = vld [vmem:[%s982] sm:$0xf]
    %v984 = vpack.c.bf16 %v981, %v981
    %v986 = vsel %vm69, %v983, 0
    %v989 = vsel %vm73, %v984, 0
    %991 = vmatpush.bf16.msra.mxu0 0
    %992 = vmatpush.bf16.msra.mxu0 0
    %993 = vmatpush.bf16.msra.mxu0 0
    %994 = vmatpush.bf16.msra.mxu0 0
    %995 = vmatpush.bf16.msra.mxu0 0
    %996 = vmatpush.bf16.msra.mxu0 0
    %997 = vmatpush.bf16.msra.mxu0 0
    %998 = vmatpush.bf16.msra.mxu0 %v989
    %999 = vmatmul.bf16.gmra.mxu0 %v986
    %v1000 = vpop.f32.mrf.mxu0
    %v1001 = vadd.f32 0.0, %v1000
    %v1002 = vpop.f32.mrf.mxu0
    %1003 = vdwg.mxu0
    %v1004 = vadd.f32 %v978, %v1001
    %1005 = vrot.lane.b32.xlu0 %v853, 121
    %v1006 = vpop.permute.xlu0 %1005
    %v1007 = vmul.f32 %v1006, %v215
    %s1008 = scalar_lea.vmem %s2, 132
    %v1009 = vld [vmem:[%s1008] sm:$0xf]
    %v1010 = vpack.c.bf16 %v1007, %v1007
    %v1012 = vsel %vm69, %v1009, 0
    %v1015 = vsel %vm73, %v1010, 0
    %1017 = vmatpush.bf16.msra.mxu0 0
    %1018 = vmatpush.bf16.msra.mxu0 0
    %1019 = vmatpush.bf16.msra.mxu0 0
    %1020 = vmatpush.bf16.msra.mxu0 0
    %1021 = vmatpush.bf16.msra.mxu0 0
    %1022 = vmatpush.bf16.msra.mxu0 0
    %1023 = vmatpush.bf16.msra.mxu0 0
    %1024 = vmatpush.bf16.msra.mxu0 %v1015
    %1025 = vmatmul.bf16.gmra.mxu0 %v1012
    %v1026 = vpop.f32.mrf.mxu0
    %v1027 = vadd.f32 0.0, %v1026
    %v1028 = vpop.f32.mrf.mxu0
    %1029 = vdwg.mxu0
    %v1030 = vadd.f32 %v1004, %v1027
    %1031 = vrot.lane.b32.xlu0 %v853, 120
    %v1032 = vpop.permute.xlu0 %1031
    %v1033 = vmul.f32 %v1032, %v242
    %s1034 = scalar_lea.vmem %s2, 136
    %v1035 = vld [vmem:[%s1034] sm:$0xf]
    %v1036 = vpack.c.bf16 %v1033, %v1033
    %v1038 = vsel %vm69, %v1035, 0
    %v1041 = vsel %vm73, %v1036, 0
    %1043 = vmatpush.bf16.msra.mxu0 0
    %1044 = vmatpush.bf16.msra.mxu0 0
    %1045 = vmatpush.bf16.msra.mxu0 0
    %1046 = vmatpush.bf16.msra.mxu0 0
    %1047 = vmatpush.bf16.msra.mxu0 0
    %1048 = vmatpush.bf16.msra.mxu0 0
    %1049 = vmatpush.bf16.msra.mxu0 0
    %1050 = vmatpush.bf16.msra.mxu0 %v1041
    %1051 = vmatmul.bf16.gmra.mxu0 %v1038
    %v1052 = vpop.f32.mrf.mxu0
    %v1053 = vadd.f32 0.0, %v1052
    %v1054 = vpop.f32.mrf.mxu0
    %1055 = vdwg.mxu0
    %v1056 = vadd.f32 %v1030, %v1053
    %1057 = vrot.lane.b32.xlu0 %v853, 119
    %v1058 = vpop.permute.xlu0 %1057
    %v1059 = vmul.f32 %v1058, %v269
    %s1060 = scalar_lea.vmem %s2, 140
    %v1061 = vld [vmem:[%s1060] sm:$0xf]
    %v1062 = vpack.c.bf16 %v1059, %v1059
    %v1064 = vsel %vm69, %v1061, 0
    %v1067 = vsel %vm73, %v1062, 0
    %1069 = vmatpush.bf16.msra.mxu0 0
    %1070 = vmatpush.bf16.msra.mxu0 0
    %1071 = vmatpush.bf16.msra.mxu0 0
    %1072 = vmatpush.bf16.msra.mxu0 0
    %1073 = vmatpush.bf16.msra.mxu0 0
    %1074 = vmatpush.bf16.msra.mxu0 0
    %1075 = vmatpush.bf16.msra.mxu0 0
    %1076 = vmatpush.bf16.msra.mxu0 %v1067
    %1077 = vmatmul.bf16.gmra.mxu0 %v1064
    %v1078 = vpop.f32.mrf.mxu0
    %v1079 = vadd.f32 0.0, %v1078
    %v1080 = vpop.f32.mrf.mxu0
    %1081 = vdwg.mxu0
    %v1082 = vadd.f32 %v1056, %v1079
    %s1083 = scalar_lea.vmem %s3, 24
    %v1084 = vld [vmem:[%s1083] sm:$0xff]
    %1085 = vadd.xlane.f32.xlu0 %v1082
    %v1086 = vpop.xlane.xlu0 %1085
    %v1087 = vmul.f32 %v1086, 0.0078125
    %v1088 = vsub.f32 %v1082, %v1087
    %v1089 = vmul.f32 %v1088, %v1088
    %1090 = vadd.xlane.f32.xlu0 %v1089
    %v1091 = vpop.xlane.xlu0 %1090
    %v1092 = vmul.f32 %v1091, 0.0078125
    %v1093 = vadd.f32 %v1092, 1e-05
    %v1094 = vrsqrt.pop %v1093
    %v1095 = vmul.f32 %v1094, %v1093
    %v1096 = vmul.f32 %v1095, %v1094
    %v1097 = vmul.f32 0.5, %v1096
    %v1098 = vsub.f32 1.5, %v1097
    %v1099 = vmul.f32 %v1094, %v1098
    %vm1100 = vweird.f32 %v1093
    %vm1101 = vweird.f32 %v1094
    %vm1102 = vmor %vm1100, %vm1101
    %v1103 = vsel %vm1102, %v1094, %v1099
    %v1104 = vmul.f32 %v1088, %v1103
    %1106 = vset.pattern.permute.xlu0 0
    %1107 = vperm.xlu0 %1106, %v1084
    %v1108 = vpop.permute.xlu0 %1107
    %v1110 = vmul.f32 %v1104, %v1108
    %1111 = vset.pattern.permute.xlu0 1
    %1112 = vperm.xlu0 %1111, %v1084
    %v1113 = vpop.permute.xlu0 %1112
    %v1115 = vadd.f32 %v1110, %v1113
    %v1116 = vmax.f32 %v1115, 0.0
    %1117 = vrot.lane.b32.xlu0 %v1116, 9
    %v1118 = vpop.permute.xlu0 %1117
    %v1119 = vmul.f32 %v1118, %v58
    %s1120 = scalar_lea.vmem %s2, 144
    %v1121 = vld [vmem:[%s1120] sm:$0xf]
    %v1122 = vpack.c.bf16 %v1119, %v1119
    %1123 = vrot.lane.b32.xlu0 %v1116, 8
    %v1124 = vpop.permute.xlu0 %1123
    %v1125 = vmul.f32 %v1124, %v64
    %s1126 = scalar_lea.vmem %s2, 148
    %v1127 = vld [vmem:[%s1126] sm:$0xf]
    %v1128 = vpack.c.bf16 %v1125, %v1125
    %v1130 = vsel %vm69, %v1127, 0
    %v1133 = vsel %vm73, %v1128, 0
    %1135 = vmatpush.bf16.msra.mxu0 0
    %1136 = vmatpush.bf16.msra.mxu0 0
    %1137 = vmatpush.bf16.msra.mxu0 0
    %1138 = vmatpush.bf16.msra.mxu0 0
    %1139 = vmatpush.bf16.msra.mxu0 0
    %1140 = vmatpush.bf16.msra.mxu0 0
    %1141 = vmatpush.bf16.msra.mxu0 0
    %1142 = vmatpush.bf16.msra.mxu0 %v1133
    %1143 = vmatmul.bf16.gmra.mxu0 %v1130
    %v1144 = vpop.f32.mrf.mxu0
    %v1145 = vadd.f32 0.0, %v1144
    %v1146 = vpop.f32.mrf.mxu0
    %1147 = vdwg.mxu0
    %v1149 = vsel %vm69, %v1121, 0
    %v1152 = vsel %vm73, %v1122, 0
    %1154 = vmatpush.bf16.msra.mxu0 0
    %1155 = vmatpush.bf16.msra.mxu0 0
    %1156 = vmatpush.bf16.msra.mxu0 0
    %1157 = vmatpush.bf16.msra.mxu0 0
    %1158 = vmatpush.bf16.msra.mxu0 0
    %1159 = vmatpush.bf16.msra.mxu0 0
    %1160 = vmatpush.bf16.msra.mxu0 0
    %1161 = vmatpush.bf16.msra.mxu0 %v1152
    %1162 = vmatmul.bf16.gmra.mxu0 %v1149
    %v1163 = vpop.f32.mrf.mxu0
    %v1164 = vadd.f32 %v1145, %v1163
    %v1165 = vpop.f32.mrf.mxu0
    %1166 = vdwg.mxu0
    %1167 = vrot.lane.b32.xlu0 %v1116, 7
    %v1168 = vpop.permute.xlu0 %1167
    %v1169 = vmul.f32 %v1168, %v111
    %s1170 = scalar_lea.vmem %s2, 152
    %v1171 = vld [vmem:[%s1170] sm:$0xf]
    %v1172 = vpack.c.bf16 %v1169, %v1169
    %v1174 = vsel %vm69, %v1171, 0
    %v1177 = vsel %vm73, %v1172, 0
    %1179 = vmatpush.bf16.msra.mxu0 0
    %1180 = vmatpush.bf16.msra.mxu0 0
    %1181 = vmatpush.bf16.msra.mxu0 0
    %1182 = vmatpush.bf16.msra.mxu0 0
    %1183 = vmatpush.bf16.msra.mxu0 0
    %1184 = vmatpush.bf16.msra.mxu0 0
    %1185 = vmatpush.bf16.msra.mxu0 0
    %1186 = vmatpush.bf16.msra.mxu0 %v1177
    %1187 = vmatmul.bf16.gmra.mxu0 %v1174
    %v1188 = vpop.f32.mrf.mxu0
    %v1189 = vadd.f32 0.0, %v1188
    %v1190 = vpop.f32.mrf.mxu0
    %1191 = vdwg.mxu0
    %v1192 = vadd.f32 %v1164, %v1189
    %1193 = vrot.lane.b32.xlu0 %v1116, 1
    %v1194 = vpop.permute.xlu0 %1193
    %v1195 = vmul.f32 %v1194, %v138
    %s1196 = scalar_lea.vmem %s2, 156
    %v1197 = vld [vmem:[%s1196] sm:$0xf]
    %v1198 = vpack.c.bf16 %v1195, %v1195
    %v1200 = vsel %vm69, %v1197, 0
    %v1203 = vsel %vm73, %v1198, 0
    %1205 = vmatpush.bf16.msra.mxu0 0
    %1206 = vmatpush.bf16.msra.mxu0 0
    %1207 = vmatpush.bf16.msra.mxu0 0
    %1208 = vmatpush.bf16.msra.mxu0 0
    %1209 = vmatpush.bf16.msra.mxu0 0
    %1210 = vmatpush.bf16.msra.mxu0 0
    %1211 = vmatpush.bf16.msra.mxu0 0
    %1212 = vmatpush.bf16.msra.mxu0 %v1203
    %1213 = vmatmul.bf16.gmra.mxu0 %v1200
    %v1214 = vpop.f32.mrf.mxu0
    %v1215 = vadd.f32 0.0, %v1214
    %v1216 = vpop.f32.mrf.mxu0
    %1217 = vdwg.mxu0
    %v1218 = vadd.f32 %v1192, %v1215
    %s1219 = scalar_lea.vmem %s2, 160
    %v1220 = vld [vmem:[%s1219] sm:$0xf]
    %v1221 = vpack.c.bf16 %v1116, %v1116
    %v1223 = vsel %vm69, %v1220, 0
    %v1226 = vsel %vm73, %v1221, 0
    %1228 = vmatpush.bf16.msra.mxu0 0
    %1229 = vmatpush.bf16.msra.mxu0 0
    %1230 = vmatpush.bf16.msra.mxu0 0
    %1231 = vmatpush.bf16.msra.mxu0 0
    %1232 = vmatpush.bf16.msra.mxu0 0
    %1233 = vmatpush.bf16.msra.mxu0 0
    %1234 = vmatpush.bf16.msra.mxu0 0
    %1235 = vmatpush.bf16.msra.mxu0 %v1226
    %1236 = vmatmul.bf16.gmra.mxu0 %v1223
    %v1237 = vpop.f32.mrf.mxu0
    %v1238 = vadd.f32 0.0, %v1237
    %v1239 = vpop.f32.mrf.mxu0
    %1240 = vdwg.mxu0
    %v1241 = vadd.f32 %v1218, %v1238
    %1242 = vrot.lane.b32.xlu0 %v1116, 127
    %v1243 = vpop.permute.xlu0 %1242
    %v1244 = vmul.f32 %v1243, %v188
    %s1245 = scalar_lea.vmem %s2, 164
    %v1246 = vld [vmem:[%s1245] sm:$0xf]
    %v1247 = vpack.c.bf16 %v1244, %v1244
    %v1249 = vsel %vm69, %v1246, 0
    %v1252 = vsel %vm73, %v1247, 0
    %1254 = vmatpush.bf16.msra.mxu0 0
    %1255 = vmatpush.bf16.msra.mxu0 0
    %1256 = vmatpush.bf16.msra.mxu0 0
    %1257 = vmatpush.bf16.msra.mxu0 0
    %1258 = vmatpush.bf16.msra.mxu0 0
    %1259 = vmatpush.bf16.msra.mxu0 0
    %1260 = vmatpush.bf16.msra.mxu0 0
    %1261 = vmatpush.bf16.msra.mxu0 %v1252
    %1262 = vmatmul.bf16.gmra.mxu0 %v1249
    %v1263 = vpop.f32.mrf.mxu0
    %v1264 = vadd.f32 0.0, %v1263
    %v1265 = vpop.f32.mrf.mxu0
    %1266 = vdwg.mxu0
    %v1267 = vadd.f32 %v1241, %v1264
    %1268 = vrot.lane.b32.xlu0 %v1116, 121
    %v1269 = vpop.permute.xlu0 %1268
    %v1270 = vmul.f32 %v1269, %v215
    %s1271 = scalar_lea.vmem %s2, 168
    %v1272 = vld [vmem:[%s1271] sm:$0xf]
    %v1273 = vpack.c.bf16 %v1270, %v1270
    %v1275 = vsel %vm69, %v1272, 0
    %v1278 = vsel %vm73, %v1273, 0
    %1280 = vmatpush.bf16.msra.mxu0 0
    %1281 = vmatpush.bf16.msra.mxu0 0
    %1282 = vmatpush.bf16.msra.mxu0 0
    %1283 = vmatpush.bf16.msra.mxu0 0
    %1284 = vmatpush.bf16.msra.mxu0 0
    %1285 = vmatpush.bf16.msra.mxu0 0
    %1286 = vmatpush.bf16.msra.mxu0 0
    %1287 = vmatpush.bf16.msra.mxu0 %v1278
    %1288 = vmatmul.bf16.gmra.mxu0 %v1275
    %v1289 = vpop.f32.mrf.mxu0
    %v1290 = vadd.f32 0.0, %v1289
    %v1291 = vpop.f32.mrf.mxu0
    %1292 = vdwg.mxu0
    %v1293 = vadd.f32 %v1267, %v1290
    %1294 = vrot.lane.b32.xlu0 %v1116, 120
    %v1295 = vpop.permute.xlu0 %1294
    %v1296 = vmul.f32 %v1295, %v242
    %s1297 = scalar_lea.vmem %s2, 172
    %v1298 = vld [vmem:[%s1297] sm:$0xf]
    %v1299 = vpack.c.bf16 %v1296, %v1296
    %v1301 = vsel %vm69, %v1298, 0
    %v1304 = vsel %vm73, %v1299, 0
    %1306 = vmatpush.bf16.msra.mxu0 0
    %1307 = vmatpush.bf16.msra.mxu0 0
    %1308 = vmatpush.bf16.msra.mxu0 0
    %1309 = vmatpush.bf16.msra.mxu0 0
    %1310 = vmatpush.bf16.msra.mxu0 0
    %1311 = vmatpush.bf16.msra.mxu0 0
    %1312 = vmatpush.bf16.msra.mxu0 0
    %1313 = vmatpush.bf16.msra.mxu0 %v1304
    %1314 = vmatmul.bf16.gmra.mxu0 %v1301
    %v1315 = vpop.f32.mrf.mxu0
    %v1316 = vadd.f32 0.0, %v1315
    %v1317 = vpop.f32.mrf.mxu0
    %1318 = vdwg.mxu0
    %v1319 = vadd.f32 %v1293, %v1316
    %1320 = vrot.lane.b32.xlu0 %v1116, 119
    %v1321 = vpop.permute.xlu0 %1320
    %v1322 = vmul.f32 %v1321, %v269
    %s1323 = scalar_lea.vmem %s2, 176
    %v1324 = vld [vmem:[%s1323] sm:$0xf]
    %v1325 = vpack.c.bf16 %v1322, %v1322
    %v1327 = vsel %vm69, %v1324, 0
    %v1330 = vsel %vm73, %v1325, 0
    %1332 = vmatpush.bf16.msra.mxu0 0
    %1333 = vmatpush.bf16.msra.mxu0 0
    %1334 = vmatpush.bf16.msra.mxu0 0
    %1335 = vmatpush.bf16.msra.mxu0 0
    %1336 = vmatpush.bf16.msra.mxu0 0
    %1337 = vmatpush.bf16.msra.mxu0 0
    %1338 = vmatpush.bf16.msra.mxu0 0
    %1339 = vmatpush.bf16.msra.mxu0 %v1330
    %1340 = vmatmul.bf16.gmra.mxu0 %v1327
    %v1341 = vpop.f32.mrf.mxu0
    %v1342 = vadd.f32 0.0, %v1341
    %v1343 = vpop.f32.mrf.mxu0
    %1344 = vdwg.mxu0
    %v1345 = vadd.f32 %v1319, %v1342
    %s1346 = scalar_lea.vmem %s3, 32
    %v1347 = vld [vmem:[%s1346] sm:$0xff]
    %1348 = vadd.xlane.f32.xlu0 %v1345
    %v1349 = vpop.xlane.xlu0 %1348
    %v1350 = vmul.f32 %v1349, 0.0078125
    %v1351 = vsub.f32 %v1345, %v1350
    %v1352 = vmul.f32 %v1351, %v1351
    %1353 = vadd.xlane.f32.xlu0 %v1352
    %v1354 = vpop.xlane.xlu0 %1353
    %v1355 = vmul.f32 %v1354, 0.0078125
    %v1356 = vadd.f32 %v1355, 1e-05
    %v1357 = vrsqrt.pop %v1356
    %v1358 = vmul.f32 %v1357, %v1356
    %v1359 = vmul.f32 %v1358, %v1357
    %v1360 = vmul.f32 0.5, %v1359
    %v1361 = vsub.f32 1.5, %v1360
    %v1362 = vmul.f32 %v1357, %v1361
    %vm1363 = vweird.f32 %v1356
    %vm1364 = vweird.f32 %v1357
    %vm1365 = vmor %vm1363, %vm1364
    %v1366 = vsel %vm1365, %v1357, %v1362
    %v1367 = vmul.f32 %v1351, %v1366
    %1369 = vset.pattern.permute.xlu0 0
    %1370 = vperm.xlu0 %1369, %v1347
    %v1371 = vpop.permute.xlu0 %1370
    %v1373 = vmul.f32 %v1367, %v1371
    %1374 = vset.pattern.permute.xlu0 1
    %1375 = vperm.xlu0 %1374, %v1347
    %v1376 = vpop.permute.xlu0 %1375
    %v1378 = vadd.f32 %v1373, %v1376
    %v1379 = vadd.f32 %v1378, %v853
    %v1380 = vmax.f32 %v1379, 0.0
    %v1381 = vld [vmem:[%s4] sm:$0xf]
    %v1382 = vpack.c.bf16 %v1380, %v1380
    %v1384 = vsel %vm69, %v1381, 0
    %v1387 = vsel %vm73, %v1382, 0
    %1389 = vmatpush.bf16.msra.mxu0 0
    %1390 = vmatpush.bf16.msra.mxu0 0
    %1391 = vmatpush.bf16.msra.mxu0 0
    %1392 = vmatpush.bf16.msra.mxu0 0
    %1393 = vmatpush.bf16.msra.mxu0 0
    %1394 = vmatpush.bf16.msra.mxu0 0
    %1395 = vmatpush.bf16.msra.mxu0 0
    %1396 = vmatpush.bf16.msra.mxu0 %v1387
    %1397 = vmatmul.bf16.gmra.mxu0 %v1384
    %v1398 = vpop.f32.mrf.mxu0
    %v1399 = vadd.f32 0.0, %v1398
    %v1400 = vpop.f32.mrf.mxu0
    %1401 = vdwg.mxu0
    %s1402 = scalar_lea.vmem %s3, 40
    %v1403 = vld [vmem:[%s1402] sm:$0xff]
    %1404 = vadd.xlane.f32.xlu0 %v1399
    %v1405 = vpop.xlane.xlu0 %1404
    %v1406 = vmul.f32 %v1405, 0.0078125
    %v1407 = vsub.f32 %v1399, %v1406
    %v1408 = vmul.f32 %v1407, %v1407
    %1409 = vadd.xlane.f32.xlu0 %v1408
    %v1410 = vpop.xlane.xlu0 %1409
    %v1411 = vmul.f32 %v1410, 0.0078125
    %v1412 = vadd.f32 %v1411, 1e-05
    %v1413 = vrsqrt.pop %v1412
    %v1414 = vmul.f32 %v1413, %v1412
    %v1415 = vmul.f32 %v1414, %v1413
    %v1416 = vmul.f32 0.5, %v1415
    %v1417 = vsub.f32 1.5, %v1416
    %v1418 = vmul.f32 %v1413, %v1417
    %vm1419 = vweird.f32 %v1412
    %vm1420 = vweird.f32 %v1413
    %vm1421 = vmor %vm1419, %vm1420
    %v1422 = vsel %vm1421, %v1413, %v1418
    %v1423 = vmul.f32 %v1407, %v1422
    %1425 = vset.pattern.permute.xlu0 0
    %1426 = vperm.xlu0 %1425, %v1403
    %v1427 = vpop.permute.xlu0 %1426
    %v1429 = vmul.f32 %v1423, %v1427
    %1430 = vset.pattern.permute.xlu0 1
    %1431 = vperm.xlu0 %1430, %v1403
    %v1432 = vpop.permute.xlu0 %1431
    %v1434 = vadd.f32 %v1429, %v1432
    %v1435 = vmax.f32 %v1434, 0.0
    %v1436 = vperm.slane %v1435, 0
    %v1437 = vmul.f32 %v1436, %v54
    %v1438 = vpack.c.bf16 %v1437, %v1437
    %v1439 = vperm.slane %v1435, 1
    %v1440 = vmul.f32 %v1439, %v54
    %v1441 = vpack.c.bf16 %v1440, %v1440
    %v1442 = vperm.slane %v1435, 2
    %v1443 = vmul.f32 %v1442, %v54
    %v1444 = vpack.c.bf16 %v1443, %v1443
    %v1445 = vld [vmem:[#allocation2] sm:$0xf]
    %v1446 = vld [vmem:[#allocation2 + $0x8] sm:$0xf]
    %v1447 = vld [vmem:[#allocation2 + $0x10] sm:$0xf]
    %v1448 = vld [vmem:[#allocation2 + $0x18] sm:$0xf]
    %v1449 = vld [vmem:[#allocation2 + $0x20] sm:$0xf]
    %v1450 = vld [vmem:[#allocation2 + $0x28] sm:$0xf]
    %v1451 = vld [vmem:[#allocation2 + $0x30] sm:$0xf]
    %v1452 = vld [vmem:[#allocation2 + $0x38] sm:$0xf]
    %v1453 = vld [vmem:[#allocation2 + $0x40] sm:$0xf]
    %v1454 = vld [vmem:[#allocation2 + $0x48] sm:$0xf]
    %v1455 = vld [vmem:[#allocation2 + $0x50] sm:$0xf]
    %v1456 = vld [vmem:[#allocation2 + $0x58] sm:$0xf]
    %v1457 = vld [vmem:[#allocation2 + $0x60] sm:$0xf]
    %v1458 = vld [vmem:[#allocation2 + $0x68] sm:$0xf]
    %v1459 = vld [vmem:[#allocation2 + $0x70] sm:$0xf]
    %v1460 = vld [vmem:[#allocation2 + $0x78] sm:$0xf]
    %v1461 = vld [vmem:[#allocation2 + $0x80] sm:$0xf]
    %v1462 = vld [vmem:[#allocation2 + $0x88] sm:$0xf]
    %v1463 = vld [vmem:[#allocation2 + $0x90] sm:$0xf]
    %v1464 = vld [vmem:[#allocation2 + $0x98] sm:$0xf]
    %v1465 = vld [vmem:[#allocation2 + $0xa0] sm:$0xf]
    %v1466 = vld [vmem:[#allocation2 + $0xa8] sm:$0xf]
    %v1467 = vld [vmem:[#allocation2 + $0xb0] sm:$0xf]
    %v1468 = vld [vmem:[#allocation2 + $0xb8] sm:$0xf]
    %v1469 = vld [vmem:[#allocation2 + $0xc0] sm:$0xf]
    %v1470 = vld [vmem:[#allocation2 + $0xc8] sm:$0xf]
    %v1471 = vld [vmem:[#allocation2 + $0xd0] sm:$0xf]
    %v1472 = vld [vmem:[#allocation2 + $0xd8] sm:$0xf]
    %v1473 = vld [vmem:[#allocation2 + $0xe0] sm:$0xf]
    %v1474 = vld [vmem:[#allocation2 + $0xe8] sm:$0xf]
    %v1475 = vld [vmem:[#allocation2 + $0xf0] sm:$0xf]
    %v1476 = vld [vmem:[#allocation2 + $0xf8] sm:$0xf]
    %v1477 = vld [vmem:[#allocation2 + $0x100] sm:$0xff]
    %v1478 = vld [vmem:[#allocation2 + $0x108] sm:$0xff]
    %v1479 = vld [vmem:[#allocation2 + $0x110] sm:$0xff]
    %v1480 = vld [vmem:[#allocation2 + $0x118] sm:$0xff]
    %v1481 = vld [vmem:[#allocation2 + $0x120] sm:$0xff]
    %v1482 = vld [vmem:[#allocation2 + $0x128] sm:$0xff]
    %v1483 = vld [vmem:[#allocation2 + $0x130] sm:$0xff]
    %v1484 = vld [vmem:[#allocation2 + $0x138] sm:$0xff]
    %v1485 = vld [vmem:[#allocation2 + $0x140] sm:$0xff]
    %v1486 = vld [vmem:[#allocation2 + $0x148] sm:$0xff]
    %v1487 = vld [vmem:[#allocation2 + $0x150] sm:$0xff]
    %v1488 = vld [vmem:[#allocation2 + $0x158] sm:$0xff]
    %v1489 = vld [vmem:[#allocation2 + $0x160] sm:$0xff]
    %v1490 = vld [vmem:[#allocation2 + $0x168] sm:$0xff]
    %v1491 = vld [vmem:[#allocation2 + $0x170] sm:$0xff]
    %v1492 = vld [vmem:[#allocation2 + $0x178] sm:$0xff]
    %v1493 = vld [vmem:[#allocation2 + $0x180] sm:$0xf]
    %v1494 = vld [vmem:[#allocation2 + $0x188] sm:$0xf]
    %v1495 = vld [vmem:[#allocation2 + $0x190] sm:$0xf]
    %v1496 = vld [vmem:[#allocation2 + $0x198] sm:$0xf]
    %v1497 = vld [vmem:[#allocation2 + $0x1a0] sm:$0xf]
    %v1498 = vld [vmem:[#allocation2 + $0x1a8] sm:$0xf]
    %v1499 = vld [vmem:[#allocation2 + $0x1b0] sm:$0xf]
    %v1500 = vld [vmem:[#allocation2 + $0x1b8] sm:$0xf]
    %v1501 = vld [vmem:[#allocation2 + $0x1c0] sm:$0xf]
    %v1502 = vld [vmem:[#allocation2 + $0x1c8] sm:$0xf]
    %v1503 = vld [vmem:[#allocation2 + $0x1d0] sm:$0xf]
    %v1504 = vld [vmem:[#allocation2 + $0x1d8] sm:$0xf]
    %v1505 = vld [vmem:[#allocation2 + $0x1e0] sm:$0xf]
    %v1506 = vld [vmem:[#allocation2 + $0x1e8] sm:$0xf]
    %v1507 = vld [vmem:[#allocation2 + $0x1f0] sm:$0xf]
    %v1508 = vld [vmem:[#allocation2 + $0x1f8] sm:$0xf]
    %v1509 = vld [vmem:[#allocation2 + $0x200] sm:$0xf]
    %v1510 = vld [vmem:[#allocation2 + $0x208] sm:$0xf]
    %v1511 = vld [vmem:[#allocation2 + $0x210] sm:$0xf]
    %v1512 = vld [vmem:[#allocation2 + $0x218] sm:$0xf]
    %v1513 = vld [vmem:[#allocation2 + $0x220] sm:$0xf]
    %v1514 = vld [vmem:[#allocation2 + $0x228] sm:$0xf]
    %v1515 = vld [vmem:[#allocation2 + $0x230] sm:$0xf]
    %v1516 = vld [vmem:[#allocation2 + $0x238] sm:$0xf]
    %v1517 = vld [vmem:[#allocation2 + $0x240] sm:$0xf]
    %v1518 = vld [vmem:[#allocation2 + $0x248] sm:$0xf]
    %v1519 = vld [vmem:[#allocation2 + $0x250] sm:$0xf]
    %v1520 = vld [vmem:[#allocation2 + $0x258] sm:$0xf]
    %v1521 = vld [vmem:[#allocation2 + $0x260] sm:$0xf]
    %v1522 = vld [vmem:[#allocation2 + $0x268] sm:$0xf]
    %v1523 = vld [vmem:[#allocation2 + $0x270] sm:$0xf]
    %v1524 = vld [vmem:[#allocation2 + $0x278] sm:$0xf]
    %v1541 = vunpack.c.l.b16 %v1461
    %v1542 = vunpack.c.l.b16 %v1462
    %v1543 = vunpack.c.l.b16 %v1463
    %v1544 = vunpack.c.l.b16 %v1464
    %v1545 = vunpack.c.l.b16 %v1465
    %v1546 = vunpack.c.l.b16 %v1466
    %v1547 = vunpack.c.l.b16 %v1467
    %v1548 = vunpack.c.l.b16 %v1468
    %v1549 = vunpack.c.l.b16 %v1469
    %v1550 = vunpack.c.l.b16 %v1470
    %v1551 = vunpack.c.l.b16 %v1471
    %v1552 = vunpack.c.l.b16 %v1472
    %v1553 = vunpack.c.l.b16 %v1473
    %v1554 = vunpack.c.l.b16 %v1474
    %v1555 = vunpack.c.l.b16 %v1475
    %v1556 = vunpack.c.l.b16 %v1476
    %v1557 = vpack.c.b16 %v1542, %v1541
    %v1558 = vpack.c.b16 %v1544, %v1543
    %v1559 = vpack.c.b16 %v1546, %v1545
    %v1560 = vpack.c.b16 %v1548, %v1547
    %v1561 = vpack.c.b16 %v1550, %v1549
    %v1562 = vpack.c.b16 %v1552, %v1551
    %v1563 = vpack.c.b16 %v1554, %v1553
    %v1564 = vpack.c.b16 %v1556, %v1555
    %1573 = vmatpush.bf16.msra.mxu0 %v1564
    %1574 = vmatpush.bf16.msra.mxu0 %v1563
    %1575 = vmatpush.bf16.msra.mxu0 %v1562
    %1576 = vmatpush.bf16.msra.mxu0 %v1561
    %1577 = vmatpush.bf16.msra.mxu0 %v1560
    %1578 = vmatpush.bf16.msra.mxu0 %v1559
    %1579 = vmatpush.bf16.msra.mxu0 %v1558
    %1580 = vmatpush.bf16.msra.mxu0 %v1557
    %1581 = vmatmul.bf16.gmra.mxu0 %v1441
    %v1582 = vpop.f32.mrf.mxu0
    %v1583 = vadd.f32 0.0, %v1582
    %v1584 = vpop.f32.mrf.mxu0
    %1585 = vdwg.mxu0
    %v1602 = vunpack.c.l.b16 %v1445
    %v1603 = vunpack.c.l.b16 %v1446
    %v1604 = vunpack.c.l.b16 %v1447
    %v1605 = vunpack.c.l.b16 %v1448
    %v1606 = vunpack.c.l.b16 %v1449
    %v1607 = vunpack.c.l.b16 %v1450
    %v1608 = vunpack.c.l.b16 %v1451
    %v1609 = vunpack.c.l.b16 %v1452
    %v1610 = vunpack.c.l.b16 %v1453
    %v1611 = vunpack.c.l.b16 %v1454
    %v1612 = vunpack.c.l.b16 %v1455
    %v1613 = vunpack.c.l.b16 %v1456
    %v1614 = vunpack.c.l.b16 %v1457
    %v1615 = vunpack.c.l.b16 %v1458
    %v1616 = vunpack.c.l.b16 %v1459
    %v1617 = vunpack.c.l.b16 %v1460
    %v1618 = vpack.c.b16 %v1603, %v1602
    %v1619 = vpack.c.b16 %v1605, %v1604
    %v1620 = vpack.c.b16 %v1607, %v1606
    %v1621 = vpack.c.b16 %v1609, %v1608
    %v1622 = vpack.c.b16 %v1611, %v1610
    %v1623 = vpack.c.b16 %v1613, %v1612
    %v1624 = vpack.c.b16 %v1615, %v1614
    %v1625 = vpack.c.b16 %v1617, %v1616
    %1634 = vmatpush.bf16.msra.mxu0 %v1625
    %1635 = vmatpush.bf16.msra.mxu0 %v1624
    %1636 = vmatpush.bf16.msra.mxu0 %v1623
    %1637 = vmatpush.bf16.msra.mxu0 %v1622
    %1638 = vmatpush.bf16.msra.mxu0 %v1621
    %1639 = vmatpush.bf16.msra.mxu0 %v1620
    %1640 = vmatpush.bf16.msra.mxu0 %v1619
    %1641 = vmatpush.bf16.msra.mxu0 %v1618
    %1642 = vmatmul.bf16.gmra.mxu0 %v1438
    %v1643 = vpop.f32.mrf.mxu0
    %v1644 = vadd.f32 %v1583, %v1643
    %v1645 = vpop.f32.mrf.mxu0
    %1646 = vdwg.mxu0
    %v1647 = vld [vmem:[%s6] sm:$0x1]
    %v1648 = vperm.slane %v1647, 0
    %v1649 = vadd.f32 %v1644, %v1648
    %1650 = vst [vmem:[#allocation5] sm:$0x3] %v1649
    %s1651 = scalar_lea.vmem %s6, 1
    %v1652 = vld [vmem:[%s1651] ss:$4 sm:$0x3]
    %v1654 = vperm.slane %v1652, 0
    %v1655 = vperm.slane %v1652, 1
    %v1674 = vunpack.c.l.b16 %v1477
    %v1675 = vunpack.c.h.b16 %v1477
    %v1676 = vunpack.c.l.b16 %v1478
    %v1677 = vunpack.c.h.b16 %v1478
    %v1678 = vunpack.c.l.b16 %v1479
    %v1679 = vunpack.c.h.b16 %v1479
    %v1680 = vunpack.c.l.b16 %v1480
    %v1681 = vunpack.c.h.b16 %v1480
    %v1682 = vunpack.c.l.b16 %v1481
    %v1683 = vunpack.c.h.b16 %v1481
    %v1684 = vunpack.c.l.b16 %v1482
    %v1685 = vunpack.c.h.b16 %v1482
    %v1686 = vunpack.c.l.b16 %v1483
    %v1687 = vunpack.c.h.b16 %v1483
    %v1688 = vunpack.c.l.b16 %v1484
    %v1689 = vunpack.c.h.b16 %v1484
    %v1690 = vunpack.c.l.b16 %v1485
    %v1691 = vunpack.c.h.b16 %v1485
    %v1692 = vunpack.c.l.b16 %v1486
    %v1693 = vunpack.c.h.b16 %v1486
    %v1694 = vunpack.c.l.b16 %v1487
    %v1695 = vunpack.c.h.b16 %v1487
    %v1696 = vunpack.c.l.b16 %v1488
    %v1697 = vunpack.c.h.b16 %v1488
    %v1698 = vunpack.c.l.b16 %v1489
    %v1699 = vunpack.c.h.b16 %v1489
    %v1700 = vunpack.c.l.b16 %v1490
    %v1701 = vunpack.c.h.b16 %v1490
    %v1702 = vunpack.c.l.b16 %v1491
    %v1703 = vunpack.c.h.b16 %v1491
    %v1704 = vunpack.c.l.b16 %v1492
    %v1705 = vunpack.c.h.b16 %v1492
    %v1706 = vpack.c.b16 %v1676, %v1674
    %v1707 = vpack.c.b16 %v1677, %v1675
    %v1708 = vpack.c.b16 %v1680, %v1678
    %v1709 = vpack.c.b16 %v1681, %v1679
    %v1710 = vpack.c.b16 %v1684, %v1682
    %v1711 = vpack.c.b16 %v1685, %v1683
    %v1712 = vpack.c.b16 %v1688, %v1686
    %v1713 = vpack.c.b16 %v1689, %v1687
    %v1714 = vpack.c.b16 %v1692, %v1690
    %v1715 = vpack.c.b16 %v1693, %v1691
    %v1716 = vpack.c.b16 %v1696, %v1694
    %v1717 = vpack.c.b16 %v1697, %v1695
    %v1718 = vpack.c.b16 %v1700, %v1698
    %v1719 = vpack.c.b16 %v1701, %v1699
    %v1720 = vpack.c.b16 %v1704, %v1702
    %v1721 = vpack.c.b16 %v1705, %v1703
    %1738 = vmatpush.bf16.msra.mxu0 %v1720
    %1739 = vmatpush.bf16.msra.mxu0 %v1718
    %1740 = vmatpush.bf16.msra.mxu0 %v1716
    %1741 = vmatpush.bf16.msra.mxu0 %v1714
    %1742 = vmatpush.bf16.msra.mxu0 %v1712
    %1743 = vmatpush.bf16.msra.mxu0 %v1710
    %1744 = vmatpush.bf16.msra.mxu0 %v1708
    %1745 = vmatpush.bf16.msra.mxu0 %v1706
    %1746 = vmatmul.bf16.gmra.mxu0 %v1444
    %v1747 = vpop.f32.mrf.mxu0
    %v1748 = vadd.f32 %v1654, %v1747
    %v1749 = vpop.f32.mrf.mxu0
    %1750 = vdwg.mxu0
    %1751 = vmatpush.bf16.msra.mxu0 %v1721
    %1752 = vmatpush.bf16.msra.mxu0 %v1719
    %1753 = vmatpush.bf16.msra.mxu0 %v1717
    %1754 = vmatpush.bf16.msra.mxu0 %v1715
    %1755 = vmatpush.bf16.msra.mxu0 %v1713
    %1756 = vmatpush.bf16.msra.mxu0 %v1711
    %1757 = vmatpush.bf16.msra.mxu0 %v1709
    %1758 = vmatpush.bf16.msra.mxu0 %v1707
    %1759 = vmatmul.bf16.gmra.mxu0 %v1444
    %v1760 = vpop.f32.mrf.mxu0
    %v1761 = vadd.f32 %v1655, %v1760
    %v1762 = vpop.f32.mrf.mxu0
    %1763 = vdwg.mxu0
    %v1764 = vmax.f32 %v1748, 0.0
    %v1765 = vmax.f32 %v1761, 0.0
    %v1766 = vpack.c.bf16 %v1764, %v1764
    %v1767 = vpack.c.bf16 %v1765, %v1765
    %v1768 = vld [vmem:[%s6 + $0x2] sm:$0x1]
    %v1769 = vperm.slane %v1768, 0
    %v1802 = vunpack.c.l.b16 %v1493
    %v1803 = vunpack.c.l.b16 %v1494
    %v1804 = vunpack.c.l.b16 %v1495
    %v1805 = vunpack.c.l.b16 %v1496
    %v1806 = vunpack.c.l.b16 %v1497
    %v1807 = vunpack.c.l.b16 %v1498
    %v1808 = vunpack.c.l.b16 %v1499
    %v1809 = vunpack.c.l.b16 %v1500
    %v1810 = vunpack.c.l.b16 %v1501
    %v1811 = vunpack.c.l.b16 %v1502
    %v1812 = vunpack.c.l.b16 %v1503
    %v1813 = vunpack.c.l.b16 %v1504
    %v1814 = vunpack.c.l.b16 %v1505
    %v1815 = vunpack.c.l.b16 %v1506
    %v1816 = vunpack.c.l.b16 %v1507
    %v1817 = vunpack.c.l.b16 %v1508
    %v1818 = vunpack.c.l.b16 %v1509
    %v1819 = vunpack.c.l.b16 %v1510
    %v1820 = vunpack.c.l.b16 %v1511
    %v1821 = vunpack.c.l.b16 %v1512
    %v1822 = vunpack.c.l.b16 %v1513
    %v1823 = vunpack.c.l.b16 %v1514
    %v1824 = vunpack.c.l.b16 %v1515
    %v1825 = vunpack.c.l.b16 %v1516
    %v1826 = vunpack.c.l.b16 %v1517
    %v1827 = vunpack.c.l.b16 %v1518
    %v1828 = vunpack.c.l.b16 %v1519
    %v1829 = vunpack.c.l.b16 %v1520
    %v1830 = vunpack.c.l.b16 %v1521
    %v1831 = vunpack.c.l.b16 %v1522
    %v1832 = vunpack.c.l.b16 %v1523
    %v1833 = vunpack.c.l.b16 %v1524
    %v1834 = vpack.c.b16 %v1803, %v1802
    %v1835 = vpack.c.b16 %v1805, %v1804
    %v1836 = vpack.c.b16 %v1807, %v1806
    %v1837 = vpack.c.b16 %v1809, %v1808
    %v1838 = vpack.c.b16 %v1811, %v1810
    %v1839 = vpack.c.b16 %v1813, %v1812
    %v1840 = vpack.c.b16 %v1815, %v1814
    %v1841 = vpack.c.b16 %v1817, %v1816
    %v1842 = vpack.c.b16 %v1819, %v1818
    %v1843 = vpack.c.b16 %v1821, %v1820
    %v1844 = vpack.c.b16 %v1823, %v1822
    %v1845 = vpack.c.b16 %v1825, %v1824
    %v1846 = vpack.c.b16 %v1827, %v1826
    %v1847 = vpack.c.b16 %v1829, %v1828
    %v1848 = vpack.c.b16 %v1831, %v1830
    %v1849 = vpack.c.b16 %v1833, %v1832
    %1866 = vmatpush.bf16.msra.mxu0 %v1841
    %1867 = vmatpush.bf16.msra.mxu0 %v1840
    %1868 = vmatpush.bf16.msra.mxu0 %v1839
    %1869 = vmatpush.bf16.msra.mxu0 %v1838
    %1870 = vmatpush.bf16.msra.mxu0 %v1837
    %1871 = vmatpush.bf16.msra.mxu0 %v1836
    %1872 = vmatpush.bf16.msra.mxu0 %v1835
    %1873 = vmatpush.bf16.msra.mxu0 %v1834
    %1874 = vmatmul.bf16.gmra.mxu0 %v1766
    %v1875 = vpop.f32.mrf.mxu0
    %v1876 = vadd.f32 %v1769, %v1875
    %v1877 = vpop.f32.mrf.mxu0
    %1878 = vdwg.mxu0
    %1879 = vmatpush.bf16.msra.mxu0 %v1849
    %1880 = vmatpush.bf16.msra.mxu0 %v1848
    %1881 = vmatpush.bf16.msra.mxu0 %v1847
    %1882 = vmatpush.bf16.msra.mxu0 %v1846
    %1883 = vmatpush.bf16.msra.mxu0 %v1845
    %1884 = vmatpush.bf16.msra.mxu0 %v1844
    %1885 = vmatpush.bf16.msra.mxu0 %v1843
    %1886 = vmatpush.bf16.msra.mxu0 %v1842
    %1887 = vmatmul.bf16.gmra.mxu0 %v1767
    %v1888 = vpop.f32.mrf.mxu0
    %v1889 = vadd.f32 %v1876, %v1888
    %v1890 = vpop.f32.mrf.mxu0
    %1891 = vdwg.mxu0
    %v1892 = vtanh.pop %v1889
    %1893 = vst [vmem:[%s8] sm:$0x3] %v1892
    // Predicated region
    $region34: #{forward.1} parent=1 // pred_check
      _
    $region35: #{forward.1} parent=1 // pred_check_branch
      %1895 = sbr.rel (0) target = $region37
    $region36: #{forward.1} parent=1 // pred_region
      %1897 = vsyncadd [#allocation4], 0
      %s1899 = sshll.u32 [#allocation5], 4
      %s1900 = int_to_ptr.vmem [resolvable:$true] %s1899
      %s1901 = sshll.u32 %s7, 4
      %s1902 = int_to_ptr.hbm [resolvable:$true] %s1901
      %1904 = dma.vmem_to_hbm [thread:$0]  %s1900, 32, %s1902, [#allocation4]
    $region37: #{forward.1} parent=1 // pred_fallthru
      _
    // Predicated region
    $region38: #{forward.1} parent=1 // pred_check
      _
    $region39: #{forward.1} parent=1 // pred_check_branch
      %1906 = sbr.rel (0) target = $region41
    $region40: #{forward.1} parent=1 // pred_region
      _
    $region41: #{forward.1} parent=1 // pred_fallthru
      _
    // Predicated region
    $region42: #{forward.1} parent=1 // pred_check
      _
    $region43: #{forward.1} parent=1 // pred_check_branch
      %1908 = sbr.rel (0) target = $region45
    $region44: #{forward.1} parent=1 // pred_region
      %1910 = dma.done [#allocation4], 32
    $region45: #{forward.1} parent=1 // pred_fallthru
      _
    // Predicated region
    $region46: #{forward.1} parent=1 // pred_check
      _
    $region47: #{forward.1} parent=1 // pred_check_branch
      %1912 = sbr.rel (0) target = $region49
    $region48: #{forward.1} parent=1 // pred_region
      _
    $region49: #{forward.1} parent=1 // pred_fallthru
      _
    %1913 = vsyncpa [#allocation3], 1
    %1914 = vsyncpa [#allocation4], 1

</llo_original>
